<compile_context>
chip_gen: v6e
topology: v6e:2x2x1
jax: 0.10.0
libtpu: 0.0.40
codegen_flags: <defaults>
</compile_context>

<pallas_src>
import math

import jax
import jax.numpy as jnp
from jax.experimental import pallas as pl
from jax.experimental.pallas import tpu as pltpu


INPUT_SIZE = 3 * 32 * 32   # 3072
HIDDEN1 = 100
OUTPUT = 10

# Lane-friendly padded widths (last dim multiple of 128 -> unmasked stores).
HIDDEN1_PAD = 128
OUTPUT_PAD = 128
ROW_ALIGN = 8              # sublane alignment for the batch dim
TB_MAX = 256               # batch tile: 256*3072*4 B = 3 MiB x-tile; with double
                           # buffering + ~1.6 MiB resident weights this fits the
                           # 16 MiB scoped VMEM default on v5e (and v6e/v7x).


def _round_up(n, m):
    return (n + m - 1) // m * m


def mlp_tanh_kernel(x_ref, w1_ref, b1_ref, w2_ref, b2_ref, o_ref):
    # Fused hot path: matmul -> bias -> tanh (EUP slot, overlaps MXU) -> matmul -> bias.
    h = jnp.dot(x_ref[...], w1_ref[...], preferred_element_type=jnp.float32)
    h = jnp.tanh(h + b1_ref[...])                       # (TB, H1p) + (1, H1p)
    out = jnp.dot(h, w2_ref[...], preferred_element_type=jnp.float32)
    o_ref[...] = out + b2_ref[...]


def prepare_params(w1, b1, w2, b2):
    """Pad parameters to lane-friendly shapes ONCE, outside the per-call hot path.

    Padded hidden/output columns have zero weights and zero biases, so they are
    inert: tanh(0) = 0 feeds zero rows of W2 and padded output columns get sliced off.
    """
    w1_p = jnp.zeros((INPUT_SIZE, HIDDEN1_PAD), jnp.float32).at[:, :HIDDEN1].set(w1)
    b1_p = jnp.zeros((1, HIDDEN1_PAD), jnp.float32).at[0, :HIDDEN1].set(b1)
    w2_p = jnp.zeros((HIDDEN1_PAD, OUTPUT_PAD), jnp.float32).at[:HIDDEN1, :OUTPUT].set(w2)
    b2_p = jnp.zeros((1, OUTPUT_PAD), jnp.float32).at[0, :OUTPUT].set(b2)
    return w1_p, b1_p, w2_p, b2_p


@jax.jit
def neural_net_tanh_forward(x, w1_p, b1_p, w2_p, b2_p):
    """Forward pass equivalent to NeuralNetTanh.forward.

    x:    any shape whose total size is B * 3072 (flattened to (B, 3072))
    w1_p: (3072, 128) zero-padded   b1_p: (1, 128) zero-padded
    w2_p: (128, 128) zero-padded    b2_p: (1, 128) zero-padded
    returns (B, 10) float32
    """
    x = x.reshape(-1, INPUT_SIZE).astype(jnp.float32)
    B = x.shape[0]

    # Batch tile: small batches get a single aligned tile; large batches are
    # split into TB_MAX-row tiles so VMEM is bounded and the x DMA pipelines.
    tb = min(TB_MAX, _round_up(max(B, 1), ROW_ALIGN))
    Bp = _round_up(max(B, 1), tb)
    x_p = x if Bp == B else jnp.pad(x, ((0, Bp - B), (0, 0)))
    n_tiles = Bp // tb

    cost = pl.CostEstimate(
        flops=2 * Bp * INPUT_SIZE * HIDDEN1_PAD + 2 * Bp * HIDDEN1_PAD * OUTPUT_PAD,
        transcendentals=Bp * HIDDEN1_PAD,
        bytes_accessed=(Bp * INPUT_SIZE * 4                     # x read
                        + INPUT_SIZE * HIDDEN1_PAD * 4          # w1
                        + HIDDEN1_PAD * OUTPUT_PAD * 4          # w2
                        + (HIDDEN1_PAD + OUTPUT_PAD) * 4        # biases
                        + Bp * OUTPUT_PAD * 4),                 # out write
    )

    out_p = pl.pallas_call(
        mlp_tanh_kernel,
        out_shape=jax.ShapeDtypeStruct((Bp, OUTPUT_PAD), jnp.float32),
        grid_spec=pltpu.PrefetchScalarGridSpec(
            num_scalar_prefetch=0,
            grid=(n_tiles,),
            in_specs=[
                # x: tiled over the batch axis
                pl.BlockSpec((tb, INPUT_SIZE), lambda i: (i, 0)),
                # weights / biases: constant block index -> resident across tiles
                pl.BlockSpec((INPUT_SIZE, HIDDEN1_PAD), lambda i: (0, 0)),
                pl.BlockSpec((1, HIDDEN1_PAD), lambda i: (0, 0)),
                pl.BlockSpec((HIDDEN1_PAD, OUTPUT_PAD), lambda i: (0, 0)),
                pl.BlockSpec((1, OUTPUT_PAD), lambda i: (0, 0)),
            ],
            out_specs=pl.BlockSpec((tb, OUTPUT_PAD), lambda i: (i, 0)),
        ),
        compiler_params=pltpu.CompilerParams(
            # batch tiles are independent -> megacore sharding on v7x, no-op on v5e/v6e
            dimension_semantics=("parallel",),
        ),
        cost_estimate=cost,
    )(x_p, w1_p, b1_p, w2_p, b2_p)

    return out_p[:B, :OUTPUT]


def init_params(key):
    """Deterministic init matching nn.Linear's default U(-1/sqrt(fan_in), 1/sqrt(fan_in))."""
    k1, k2, k3, k4 = jax.random.split(key, 4)
    bound1 = 1.0 / math.sqrt(INPUT_SIZE)
    bound2 = 1.0 / math.sqrt(HIDDEN1)
    w1 = jax.random.uniform(k1, (INPUT_SIZE, HIDDEN1), jnp.float32, -bound1, bound1)
    b1 = jax.random.uniform(k2, (HIDDEN1,), jnp.float32, -bound1, bound1)
    w2 = jax.random.uniform(k3, (HIDDEN1, OUTPUT), jnp.float32, -bound2, bound2)
    b2 = jax.random.uniform(k4, (OUTPUT,), jnp.float32, -bound2, bound2)
    return w1, b1, w2, b2


if __name__ == "__main__":
    key = jax.random.PRNGKey(0)
    kx, kx2, kp = jax.random.split(key, 3)

    w1, b1, w2, b2 = init_params(kp)
    # Parameters padded once (outside the hot path).
    w1_p, b1_p, w2_p, b2_p = prepare_params(w1, b1, w2, b2)

    # Small CIFAR-like batch (B, 3, 32, 32); forward flattens to (B, 3072).
    B = 2
    x = jax.random.normal(kx, (B, 3, 32, 32), jnp.float32)
    out = jax.block_until_ready(neural_net_tanh_forward(x, w1_p, b1_p, w2_p, b2_p))

    x_flat = x.reshape(-1, INPUT_SIZE)
    ref = jnp.tanh(x_flat @ w1 + b1) @ w2 + b2
    assert out.shape == (B, OUTPUT)
    assert jnp.allclose(out, ref, atol=1e-4, rtol=1e-4)

    # Larger ragged batch exercises multi-tile grid + padded last tile.
    B2 = 300
    x2 = jax.random.normal(kx2, (B2, 3, 32, 32), jnp.float32)
    out2 = jax.block_until_ready(neural_net_tanh_forward(x2, w1_p, b1_p, w2_p, b2_p))
    ref2 = jnp.tanh(x2.reshape(-1, INPUT_SIZE) @ w1 + b1) @ w2 + b2
    assert out2.shape == (B2, OUTPUT)
    assert jnp.allclose(out2, ref2, atol=1e-4, rtol=1e-4)

    print("KERNEL_OK")
</pallas_src>

<mosaic_0001>
module attributes {stable_mosaic.version = 11 : i64} {
  func.func @mlp_tanh_kernel(%arg0: i32, %arg1: memref<8x3072xf32, #tpu.memory_space<vmem>>, %arg2: memref<3072x128xf32, #tpu.memory_space<vmem>>, %arg3: memref<1x128xf32, #tpu.memory_space<vmem>>, %arg4: memref<128x128xf32, #tpu.memory_space<vmem>>, %arg5: memref<1x128xf32, #tpu.memory_space<vmem>>, %arg6: memref<8x128xf32, #tpu.memory_space<vmem>>) attributes {dimension_semantics = [#tpu.dimension_semantics<parallel>], iteration_bounds = array<i64: 1>, scalar_prefetch = 0 : i64, scratch_operands = 0 : i64, tpu.core_type = #tpu.core_type<tc>, window_params = [{transform_indices = @transform_0, window_bounds = array<i64: 8, 3072>}, {pipeline_mode = #tpu.pipeline_mode<synchronous>, transform_indices = @transform_1, window_bounds = array<i64: 3072, 128>}, {pipeline_mode = #tpu.pipeline_mode<synchronous>, transform_indices = @transform_2, window_bounds = array<i64: 1, 128>}, {pipeline_mode = #tpu.pipeline_mode<synchronous>, transform_indices = @transform_3, window_bounds = array<i64: 128, 128>}, {pipeline_mode = #tpu.pipeline_mode<synchronous>, transform_indices = @transform_4, window_bounds = array<i64: 1, 128>}, {transform_indices = @transform_5, window_bounds = array<i64: 8, 128>}]} {
    %c0 = arith.constant 0 : index
    %c0_0 = arith.constant 0 : index
    %0 = vector.load %arg1[%c0, %c0_0] : memref<8x3072xf32, #tpu.memory_space<vmem>>, vector<8x3072xf32>
    %c0_1 = arith.constant 0 : index
    %c0_2 = arith.constant 0 : index
    %1 = vector.load %arg2[%c0_1, %c0_2] : memref<3072x128xf32, #tpu.memory_space<vmem>>, vector<3072x128xf32>
    %cst = arith.constant dense<0.000000e+00> : vector<8x128xf32>
    %2 = tpu.matmul %0, %1, %cst {dimension_numbers = #tpu.dot_dimension_numbers<[1], [0], [0], [1], [0, 0, 1, 1], [], []>} : vector<8x3072xf32>, vector<3072x128xf32>, vector<8x128xf32> -> vector<8x128xf32>
    %c0_3 = arith.constant 0 : index
    %c0_4 = arith.constant 0 : index
    %3 = vector.load %arg3[%c0_3, %c0_4] : memref<1x128xf32, #tpu.memory_space<vmem>>, vector<1x128xf32>
    %4 = vector.broadcast %3 : vector<1x128xf32> to vector<8x128xf32>
    %5 = arith.addf %2, %4 : vector<8x128xf32>
    %6 = math.tanh %5 : vector<8x128xf32>
    %c0_5 = arith.constant 0 : index
    %c0_6 = arith.constant 0 : index
    %7 = vector.load %arg4[%c0_5, %c0_6] : memref<128x128xf32, #tpu.memory_space<vmem>>, vector<128x128xf32>
    %cst_7 = arith.constant dense<0.000000e+00> : vector<8x128xf32>
    %8 = tpu.matmul %6, %7, %cst_7 {dimension_numbers = #tpu.dot_dimension_numbers<[1], [0], [0], [1], [0, 0, 1, 1], [], []>} : vector<8x128xf32>, vector<128x128xf32>, vector<8x128xf32> -> vector<8x128xf32>
    %c0_8 = arith.constant 0 : index
    %c0_9 = arith.constant 0 : index
    %9 = vector.load %arg5[%c0_8, %c0_9] : memref<1x128xf32, #tpu.memory_space<vmem>>, vector<1x128xf32>
    %10 = vector.broadcast %9 : vector<1x128xf32> to vector<8x128xf32>
    %11 = arith.addf %8, %10 : vector<8x128xf32>
    %c0_10 = arith.constant 0 : index
    %c0_11 = arith.constant 0 : index
    %12 = vector.load %arg6[%c0_10, %c0_11] : memref<8x128xf32, #tpu.memory_space<vmem>>, vector<8x128xf32>
    tpu.vector_store %arg6[%c0_10, %c0_11], %11 {strides = array<i32>} : memref<8x128xf32, #tpu.memory_space<vmem>>, vector<8x128xf32>,
    return
  }
  func.func @transform_0(%arg0: i32) -> (i32, i32) {
    %c0_i32 = arith.constant 0 : i32
    %c0_i32_0 = arith.constant 0 : i32
    return %arg0, %c0_i32 : i32, i32
  }
  func.func @transform_1(%arg0: i32) -> (i32, i32) {
    %c0_i32 = arith.constant 0 : i32
    %c0_i32_0 = arith.constant 0 : i32
    %c0_i32_1 = arith.constant 0 : i32
    return %c0_i32, %c0_i32_0 : i32, i32
  }
  func.func @transform_2(%arg0: i32) -> (i32, i32) {
    %c0_i32 = arith.constant 0 : i32
    %c0_i32_0 = arith.constant 0 : i32
    %c0_i32_1 = arith.constant 0 : i32
    return %c0_i32, %c0_i32_0 : i32, i32
  }
  func.func @transform_3(%arg0: i32) -> (i32, i32) {
    %c0_i32 = arith.constant 0 : i32
    %c0_i32_0 = arith.constant 0 : i32
    %c0_i32_1 = arith.constant 0 : i32
    return %c0_i32, %c0_i32_0 : i32, i32
  }
  func.func @transform_4(%arg0: i32) -> (i32, i32) {
    %c0_i32 = arith.constant 0 : i32
    %c0_i32_0 = arith.constant 0 : i32
    %c0_i32_1 = arith.constant 0 : i32
    return %c0_i32, %c0_i32_0 : i32, i32
  }
  func.func @transform_5(%arg0: i32) -> (i32, i32) {
    %c0_i32 = arith.constant 0 : i32
    %c0_i32_0 = arith.constant 0 : i32
    return %arg0, %c0_i32 : i32, i32
  }
}

</mosaic_0001>

<llo_original>
// kernel: neural_net_tanh_forward.1
$region0: #{neural_net_tanh_forward.1}
  #allocation0 [shape = 'u32[]', space=smem, size = 0x4, offset = 0x4, fixed_abs, tag = 'smem constant byte address 0x4 - core index']
  #allocation1 [shape = 'u32[144,128]{1,0:T(1,128)}', space=vmem, size = 0x12000, scoped, tag = 'internal scratch']
  %s0 = inlined_call_operand.vmem [shape: f32[8,3072], index: 0, kind: input, shape index: {}]
  %s1 = inlined_call_operand.hbm [shape: f32[3072,128], index: 1, kind: input, shape index: {}]
  %s2 = inlined_call_operand.hbm [shape: f32[1,128], index: 2, kind: input, shape index: {}]
  %s3 = inlined_call_operand.hbm [shape: f32[128,128], index: 3, kind: input, shape index: {}]
  %s4 = inlined_call_operand.hbm [shape: f32[1,128], index: 4, kind: input, shape index: {}]
  %s5 = inlined_call_operand.vmem [shape: f32[8,128], index: 5, kind: output, shape index: {}]
  %s6 = sld [smem:[#allocation0]]
  $region46: #{neural_net_tanh_forward.1} parent=0
    _
  %s8 = ssub.s32 1, %s6
  %s9 = scalar_select 0, %s8, %s6
  $region1: #{neural_net_tanh_forward.1} parent=0
    #allocation2 [shape = 'u8[1572864]{0}', space=vmem, size = 0x180000, scoped, tag = 'input window, operand 1, single buffered']
    #allocation3 [shape = 's32[1]{0}', space=sflag, size = 0x4, scoped, tag = 'scoped memory for neural_net_tanh_forward.1']
    #allocation4 [shape = 'u8[512]{0}', space=vmem, size = 0x400, scoped, tag = 'input window, operand 2, single buffered']
    #allocation5 [shape = 's32[1]{0}', space=sflag, size = 0x4, scoped, tag = 'scoped memory for neural_net_tanh_forward.1']
    #allocation6 [shape = 'u8[65536]{0}', space=vmem, size = 0x10000, scoped, tag = 'input window, operand 3, single buffered']
    #allocation7 [shape = 'u8[512]{0}', space=vmem, size = 0x400, scoped, tag = 'input window, operand 4, single buffered']
    #allocation8 [shape = 's32[1]{0}', space=sflag, size = 0x4, scoped, tag = 'scoped memory for neural_net_tanh_forward.1']
    %10 = vsyncpa [#allocation3], 0
    %11 = vsyncpa [#allocation5], 0
    %12 = vsyncpa [#allocation8], 0
    // Predicated region
    $region2: #{neural_net_tanh_forward.1} parent=1 // pred_check
      _
    $region3: #{neural_net_tanh_forward.1} parent=1 // pred_check_branch
      %14 = sbr.rel (0) target = $region5
    $region4: #{neural_net_tanh_forward.1} parent=1 // pred_region
      _
    $region5: #{neural_net_tanh_forward.1} parent=1 // pred_fallthru
      _
    // Predicated region
    $region6: #{neural_net_tanh_forward.1} parent=1 // pred_check
      _
    $region7: #{neural_net_tanh_forward.1} parent=1 // pred_check_branch
      %16 = sbr.rel (0) target = $region9
    $region8: #{neural_net_tanh_forward.1} parent=1 // pred_region
      %s18 = ssub.s32 49152, 49152
      %19 = vsyncadd [#allocation3], %s18
      %s20 = sshll.u32 [#allocation2], 4
      %s21 = int_to_ptr.vmem [resolvable:$true] %s20
      %26 = dma.hbm_to_vmem [thread:$0]  %s1, 49152, %s21, [#allocation3], 128, 128, 8
    $region9: #{neural_net_tanh_forward.1} parent=1 // pred_fallthru
      _
    // Predicated region
    $region10: #{neural_net_tanh_forward.1} parent=1 // pred_check
      _
    $region11: #{neural_net_tanh_forward.1} parent=1 // pred_check_branch
      %28 = sbr.rel (0) target = $region13
    $region12: #{neural_net_tanh_forward.1} parent=1 // pred_region
      %s30 = ssub.s32 16, 16
      %31 = vsyncadd [#allocation5], %s30
      %s33 = sshll.u32 [#allocation4], 4
      %s34 = int_to_ptr.vmem [resolvable:$true] %s33
      %36 = dma.hbm_to_vmem [thread:$0]  %s2, 16, %s34, [#allocation5]
    $region13: #{neural_net_tanh_forward.1} parent=1 // pred_fallthru
      _
    // Predicated region
    $region14: #{neural_net_tanh_forward.1} parent=1 // pred_check
      _
    $region15: #{neural_net_tanh_forward.1} parent=1 // pred_check_branch
      %38 = sbr.rel (0) target = $region17
    $region16: #{neural_net_tanh_forward.1} parent=1 // pred_region
      %s40 = ssub.s32 2048, 2048
      %41 = vsyncadd [#allocation5], %s40
      %s42 = sshll.u32 [#allocation6], 4
      %s43 = int_to_ptr.vmem [resolvable:$true] %s42
      %48 = dma.hbm_to_vmem [thread:$0]  %s3, 2048, %s43, [#allocation5], 128, 128, 8
    $region17: #{neural_net_tanh_forward.1} parent=1 // pred_fallthru
      _
    // Predicated region
    $region18: #{neural_net_tanh_forward.1} parent=1 // pred_check
      _
    $region19: #{neural_net_tanh_forward.1} parent=1 // pred_check_branch
      %50 = sbr.rel (0) target = $region21
    $region20: #{neural_net_tanh_forward.1} parent=1 // pred_region
      %s52 = ssub.s32 16, 16
      %53 = vsyncadd [#allocation8], %s52
      %s55 = sshll.u32 [#allocation7], 4
      %s56 = int_to_ptr.vmem [resolvable:$true] %s55
      %58 = dma.hbm_to_vmem [thread:$0]  %s4, 16, %s56, [#allocation8]
    $region21: #{neural_net_tanh_forward.1} parent=1 // pred_fallthru
      _
    // Predicated region
    $region22: #{neural_net_tanh_forward.1} parent=1 // pred_check
      _
    $region23: #{neural_net_tanh_forward.1} parent=1 // pred_check_branch
      %60 = sbr.rel (0) target = $region25
    $region24: #{neural_net_tanh_forward.1} parent=1 // pred_region
      %61 = dma.done [#allocation3], 49152
    $region25: #{neural_net_tanh_forward.1} parent=1 // pred_fallthru
      _
    // Predicated region
    $region26: #{neural_net_tanh_forward.1} parent=1 // pred_check
      _
    $region27: #{neural_net_tanh_forward.1} parent=1 // pred_check_branch
      %63 = sbr.rel (0) target = $region29
    $region28: #{neural_net_tanh_forward.1} parent=1 // pred_region
      %64 = dma.done [#allocation5], 16
    $region29: #{neural_net_tanh_forward.1} parent=1 // pred_fallthru
      _
    // Predicated region
    $region30: #{neural_net_tanh_forward.1} parent=1 // pred_check
      _
    $region31: #{neural_net_tanh_forward.1} parent=1 // pred_check_branch
      %66 = sbr.rel (0) target = $region33
    $region32: #{neural_net_tanh_forward.1} parent=1 // pred_region
      %67 = dma.done [#allocation5], 2048
    $region33: #{neural_net_tanh_forward.1} parent=1 // pred_fallthru
      _
    // Predicated region
    $region34: #{neural_net_tanh_forward.1} parent=1 // pred_check
      _
    $region35: #{neural_net_tanh_forward.1} parent=1 // pred_check_branch
      %69 = sbr.rel (0) target = $region37
    $region36: #{neural_net_tanh_forward.1} parent=1 // pred_region
      %70 = dma.done [#allocation8], 16
    $region37: #{neural_net_tanh_forward.1} parent=1 // pred_fallthru
      _
    %v71 = vld [vmem:[%s0] sm:$0xff]
    %v72 = vld [vmem:[%s0 + $0x8] sm:$0xff]
    %v73 = vld [vmem:[%s0 + $0x10] sm:$0xff]
    %v74 = vld [vmem:[%s0 + $0x18] sm:$0xff]
    %v75 = vld [vmem:[%s0 + $0x20] sm:$0xff]
    %v76 = vld [vmem:[%s0 + $0x28] sm:$0xff]
    %v77 = vld [vmem:[%s0 + $0x30] sm:$0xff]
    %v78 = vld [vmem:[%s0 + $0x38] sm:$0xff]
    %v79 = vld [vmem:[%s0 + $0x40] sm:$0xff]
    %v80 = vld [vmem:[%s0 + $0x48] sm:$0xff]
    %v81 = vld [vmem:[%s0 + $0x50] sm:$0xff]
    %v82 = vld [vmem:[%s0 + $0x58] sm:$0xff]
    %v83 = vld [vmem:[%s0 + $0x60] sm:$0xff]
    %v84 = vld [vmem:[%s0 + $0x68] sm:$0xff]
    %v85 = vld [vmem:[%s0 + $0x70] sm:$0xff]
    %v86 = vld [vmem:[%s0 + $0x78] sm:$0xff]
    %v87 = vld [vmem:[%s0 + $0x80] sm:$0xff]
    %v88 = vld [vmem:[%s0 + $0x88] sm:$0xff]
    %v89 = vld [vmem:[%s0 + $0x90] sm:$0xff]
    %v90 = vld [vmem:[%s0 + $0x98] sm:$0xff]
    %v91 = vld [vmem:[%s0 + $0xa0] sm:$0xff]
    %v92 = vld [vmem:[%s0 + $0xa8] sm:$0xff]
    %v93 = vld [vmem:[%s0 + $0xb0] sm:$0xff]
    %v94 = vld [vmem:[%s0 + $0xb8] sm:$0xff]
    %v95 = vld [vmem:[#allocation2] sm:$0xff]
    %v96 = vld [vmem:[#allocation2 + $0x8] sm:$0xff]
    %v97 = vld [vmem:[#allocation2 + $0x10] sm:$0xff]
    %v98 = vld [vmem:[#allocation2 + $0x18] sm:$0xff]
    %v99 = vld [vmem:[#allocation2 + $0x20] sm:$0xff]
    %v100 = vld [vmem:[#allocation2 + $0x28] sm:$0xff]
    %v101 = vld [vmem:[#allocation2 + $0x30] sm:$0xff]
    %v102 = vld [vmem:[#allocation2 + $0x38] sm:$0xff]
    %v103 = vld [vmem:[#allocation2 + $0x40] sm:$0xff]
    %v104 = vld [vmem:[#allocation2 + $0x48] sm:$0xff]
    %v105 = vld [vmem:[#allocation2 + $0x50] sm:$0xff]
    %v106 = vld [vmem:[#allocation2 + $0x58] sm:$0xff]
    %v107 = vld [vmem:[#allocation2 + $0x60] sm:$0xff]
    %v108 = vld [vmem:[#allocation2 + $0x68] sm:$0xff]
    %v109 = vld [vmem:[#allocation2 + $0x70] sm:$0xff]
    %v110 = vld [vmem:[#allocation2 + $0x78] sm:$0xff]
    %v111 = vld [vmem:[#allocation2 + $0x80] sm:$0xff]
    %v112 = vld [vmem:[#allocation2 + $0x88] sm:$0xff]
    %v113 = vld [vmem:[#allocation2 + $0x90] sm:$0xff]
    %v114 = vld [vmem:[#allocation2 + $0x98] sm:$0xff]
    %v115 = vld [vmem:[#allocation2 + $0xa0] sm:$0xff]
    %v116 = vld [vmem:[#allocation2 + $0xa8] sm:$0xff]
    %v117 = vld [vmem:[#allocation2 + $0xb0] sm:$0xff]
    %v118 = vld [vmem:[#allocation2 + $0xb8] sm:$0xff]
    %v119 = vld [vmem:[#allocation2 + $0xc0] sm:$0xff]
    %v120 = vld [vmem:[#allocation2 + $0xc8] sm:$0xff]
    %v121 = vld [vmem:[#allocation2 + $0xd0] sm:$0xff]
    %v122 = vld [vmem:[#allocation2 + $0xd8] sm:$0xff]
    %v123 = vld [vmem:[#allocation2 + $0xe0] sm:$0xff]
    %v124 = vld [vmem:[#allocation2 + $0xe8] sm:$0xff]
    %v125 = vld [vmem:[#allocation2 + $0xf0] sm:$0xff]
    %v126 = vld [vmem:[#allocation2 + $0xf8] sm:$0xff]
    %v127 = vld [vmem:[#allocation2 + $0x100] sm:$0xff]
    %v128 = vld [vmem:[#allocation2 + $0x108] sm:$0xff]
    %v129 = vld [vmem:[#allocation2 + $0x110] sm:$0xff]
    %v130 = vld [vmem:[#allocation2 + $0x118] sm:$0xff]
    %v131 = vld [vmem:[#allocation2 + $0x120] sm:$0xff]
    %v132 = vld [vmem:[#allocation2 + $0x128] sm:$0xff]
    %v133 = vld [vmem:[#allocation2 + $0x130] sm:$0xff]
    %v134 = vld [vmem:[#allocation2 + $0x138] sm:$0xff]
    %v135 = vld [vmem:[#allocation2 + $0x140] sm:$0xff]
    %v136 = vld [vmem:[#allocation2 + $0x148] sm:$0xff]
    %v137 = vld [vmem:[#allocation2 + $0x150] sm:$0xff]
    %v138 = vld [vmem:[#allocation2 + $0x158] sm:$0xff]
    %v139 = vld [vmem:[#allocation2 + $0x160] sm:$0xff]
    %v140 = vld [vmem:[#allocation2 + $0x168] sm:$0xff]
    %v141 = vld [vmem:[#allocation2 + $0x170] sm:$0xff]
    %v142 = vld [vmem:[#allocation2 + $0x178] sm:$0xff]
    %v143 = vld [vmem:[#allocation2 + $0x180] sm:$0xff]
    %v144 = vld [vmem:[#allocation2 + $0x188] sm:$0xff]
    %v145 = vld [vmem:[#allocation2 + $0x190] sm:$0xff]
    %v146 = vld [vmem:[#allocation2 + $0x198] sm:$0xff]
    %v147 = vld [vmem:[#allocation2 + $0x1a0] sm:$0xff]
    %v148 = vld [vmem:[#allocation2 + $0x1a8] sm:$0xff]
    %v149 = vld [vmem:[#allocation2 + $0x1b0] sm:$0xff]
    %v150 = vld [vmem:[#allocation2 + $0x1b8] sm:$0xff]
    %v151 = vld [vmem:[#allocation2 + $0x1c0] sm:$0xff]
    %v152 = vld [vmem:[#allocation2 + $0x1c8] sm:$0xff]
    %v153 = vld [vmem:[#allocation2 + $0x1d0] sm:$0xff]
    %v154 = vld [vmem:[#allocation2 + $0x1d8] sm:$0xff]
    %v155 = vld [vmem:[#allocation2 + $0x1e0] sm:$0xff]
    %v156 = vld [vmem:[#allocation2 + $0x1e8] sm:$0xff]
    %v157 = vld [vmem:[#allocation2 + $0x1f0] sm:$0xff]
    %v158 = vld [vmem:[#allocation2 + $0x1f8] sm:$0xff]
    %v159 = vld [vmem:[#allocation2 + $0x200] sm:$0xff]
    %v160 = vld [vmem:[#allocation2 + $0x208] sm:$0xff]
    %v161 = vld [vmem:[#allocation2 + $0x210] sm:$0xff]
    %v162 = vld [vmem:[#allocation2 + $0x218] sm:$0xff]
    %v163 = vld [vmem:[#allocation2 + $0x220] sm:$0xff]
    %v164 = vld [vmem:[#allocation2 + $0x228] sm:$0xff]
    %v165 = vld [vmem:[#allocation2 + $0x230] sm:$0xff]
    %v166 = vld [vmem:[#allocation2 + $0x238] sm:$0xff]
    %v167 = vld [vmem:[#allocation2 + $0x240] sm:$0xff]
    %v168 = vld [vmem:[#allocation2 + $0x248] sm:$0xff]
    %v169 = vld [vmem:[#allocation2 + $0x250] sm:$0xff]
    %v170 = vld [vmem:[#allocation2 + $0x258] sm:$0xff]
    %v171 = vld [vmem:[#allocation2 + $0x260] sm:$0xff]
    %v172 = vld [vmem:[#allocation2 + $0x268] sm:$0xff]
    %v173 = vld [vmem:[#allocation2 + $0x270] sm:$0xff]
    %v174 = vld [vmem:[#allocation2 + $0x278] sm:$0xff]
    %v175 = vld [vmem:[#allocation2 + $0x280] sm:$0xff]
    %v176 = vld [vmem:[#allocation2 + $0x288] sm:$0xff]
    %v177 = vld [vmem:[#allocation2 + $0x290] sm:$0xff]
    %v178 = vld [vmem:[#allocation2 + $0x298] sm:$0xff]
    %v179 = vld [vmem:[#allocation2 + $0x2a0] sm:$0xff]
    %v180 = vld [vmem:[#allocation2 + $0x2a8] sm:$0xff]
    %v181 = vld [vmem:[#allocation2 + $0x2b0] sm:$0xff]
    %v182 = vld [vmem:[#allocation2 + $0x2b8] sm:$0xff]
    %v183 = vld [vmem:[#allocation2 + $0x2c0] sm:$0xff]
    %v184 = vld [vmem:[#allocation2 + $0x2c8] sm:$0xff]
    %v185 = vld [vmem:[#allocation2 + $0x2d0] sm:$0xff]
    %v186 = vld [vmem:[#allocation2 + $0x2d8] sm:$0xff]
    %v187 = vld [vmem:[#allocation2 + $0x2e0] sm:$0xff]
    %v188 = vld [vmem:[#allocation2 + $0x2e8] sm:$0xff]
    %v189 = vld [vmem:[#allocation2 + $0x2f0] sm:$0xff]
    %v190 = vld [vmem:[#allocation2 + $0x2f8] sm:$0xff]
    %v191 = vld [vmem:[#allocation2 + $0x300] sm:$0xff]
    %v192 = vld [vmem:[#allocation2 + $0x308] sm:$0xff]
    %v193 = vld [vmem:[#allocation2 + $0x310] sm:$0xff]
    %v194 = vld [vmem:[#allocation2 + $0x318] sm:$0xff]
    %v195 = vld [vmem:[#allocation2 + $0x320] sm:$0xff]
    %v196 = vld [vmem:[#allocation2 + $0x328] sm:$0xff]
    %v197 = vld [vmem:[#allocation2 + $0x330] sm:$0xff]
    %v198 = vld [vmem:[#allocation2 + $0x338] sm:$0xff]
    %v199 = vld [vmem:[#allocation2 + $0x340] sm:$0xff]
    %v200 = vld [vmem:[#allocation2 + $0x348] sm:$0xff]
    %v201 = vld [vmem:[#allocation2 + $0x350] sm:$0xff]
    %v202 = vld [vmem:[#allocation2 + $0x358] sm:$0xff]
    %v203 = vld [vmem:[#allocation2 + $0x360] sm:$0xff]
    %v204 = vld [vmem:[#allocation2 + $0x368] sm:$0xff]
    %v205 = vld [vmem:[#allocation2 + $0x370] sm:$0xff]
    %v206 = vld [vmem:[#allocation2 + $0x378] sm:$0xff]
    %v207 = vld [vmem:[#allocation2 + $0x380] sm:$0xff]
    %v208 = vld [vmem:[#allocation2 + $0x388] sm:$0xff]
    %v209 = vld [vmem:[#allocation2 + $0x390] sm:$0xff]
    %v210 = vld [vmem:[#allocation2 + $0x398] sm:$0xff]
    %v211 = vld [vmem:[#allocation2 + $0x3a0] sm:$0xff]
    %v212 = vld [vmem:[#allocation2 + $0x3a8] sm:$0xff]
    %v213 = vld [vmem:[#allocation2 + $0x3b0] sm:$0xff]
    %v214 = vld [vmem:[#allocation2 + $0x3b8] sm:$0xff]
    %v215 = vld [vmem:[#allocation2 + $0x3c0] sm:$0xff]
    %v216 = vld [vmem:[#allocation2 + $0x3c8] sm:$0xff]
    %v217 = vld [vmem:[#allocation2 + $0x3d0] sm:$0xff]
    %v218 = vld [vmem:[#allocation2 + $0x3d8] sm:$0xff]
    %v219 = vld [vmem:[#allocation2 + $0x3e0] sm:$0xff]
    %v220 = vld [vmem:[#allocation2 + $0x3e8] sm:$0xff]
    %v221 = vld [vmem:[#allocation2 + $0x3f0] sm:$0xff]
    %v222 = vld [vmem:[#allocation2 + $0x3f8] sm:$0xff]
    %v223 = vld [vmem:[#allocation2 + $0x400] sm:$0xff]
    %v224 = vld [vmem:[#allocation2 + $0x408] sm:$0xff]
    %v225 = vld [vmem:[#allocation2 + $0x410] sm:$0xff]
    %v226 = vld [vmem:[#allocation2 + $0x418] sm:$0xff]
    %v227 = vld [vmem:[#allocation2 + $0x420] sm:$0xff]
    %v228 = vld [vmem:[#allocation2 + $0x428] sm:$0xff]
    %v229 = vld [vmem:[#allocation2 + $0x430] sm:$0xff]
    %v230 = vld [vmem:[#allocation2 + $0x438] sm:$0xff]
    %v231 = vld [vmem:[#allocation2 + $0x440] sm:$0xff]
    %v232 = vld [vmem:[#allocation2 + $0x448] sm:$0xff]
    %v233 = vld [vmem:[#allocation2 + $0x450] sm:$0xff]
    %v234 = vld [vmem:[#allocation2 + $0x458] sm:$0xff]
    %v235 = vld [vmem:[#allocation2 + $0x460] sm:$0xff]
    %v236 = vld [vmem:[#allocation2 + $0x468] sm:$0xff]
    %v237 = vld [vmem:[#allocation2 + $0x470] sm:$0xff]
    %v238 = vld [vmem:[#allocation2 + $0x478] sm:$0xff]
    %v239 = vld [vmem:[#allocation2 + $0x480] sm:$0xff]
    %v240 = vld [vmem:[#allocation2 + $0x488] sm:$0xff]
    %v241 = vld [vmem:[#allocation2 + $0x490] sm:$0xff]
    %v242 = vld [vmem:[#allocation2 + $0x498] sm:$0xff]
    %v243 = vld [vmem:[#allocation2 + $0x4a0] sm:$0xff]
    %v244 = vld [vmem:[#allocation2 + $0x4a8] sm:$0xff]
    %v245 = vld [vmem:[#allocation2 + $0x4b0] sm:$0xff]
    %v246 = vld [vmem:[#allocation2 + $0x4b8] sm:$0xff]
    %v247 = vld [vmem:[#allocation2 + $0x4c0] sm:$0xff]
    %v248 = vld [vmem:[#allocation2 + $0x4c8] sm:$0xff]
    %v249 = vld [vmem:[#allocation2 + $0x4d0] sm:$0xff]
    %v250 = vld [vmem:[#allocation2 + $0x4d8] sm:$0xff]
    %v251 = vld [vmem:[#allocation2 + $0x4e0] sm:$0xff]
    %v252 = vld [vmem:[#allocation2 + $0x4e8] sm:$0xff]
    %v253 = vld [vmem:[#allocation2 + $0x4f0] sm:$0xff]
    %v254 = vld [vmem:[#allocation2 + $0x4f8] sm:$0xff]
    %v255 = vld [vmem:[#allocation2 + $0x500] sm:$0xff]
    %v256 = vld [vmem:[#allocation2 + $0x508] sm:$0xff]
    %v257 = vld [vmem:[#allocation2 + $0x510] sm:$0xff]
    %v258 = vld [vmem:[#allocation2 + $0x518] sm:$0xff]
    %v259 = vld [vmem:[#allocation2 + $0x520] sm:$0xff]
    %v260 = vld [vmem:[#allocation2 + $0x528] sm:$0xff]
    %v261 = vld [vmem:[#allocation2 + $0x530] sm:$0xff]
    %v262 = vld [vmem:[#allocation2 + $0x538] sm:$0xff]
    %v263 = vld [vmem:[#allocation2 + $0x540] sm:$0xff]
    %v264 = vld [vmem:[#allocation2 + $0x548] sm:$0xff]
    %v265 = vld [vmem:[#allocation2 + $0x550] sm:$0xff]
    %v266 = vld [vmem:[#allocation2 + $0x558] sm:$0xff]
    %v267 = vld [vmem:[#allocation2 + $0x560] sm:$0xff]
    %v268 = vld [vmem:[#allocation2 + $0x568] sm:$0xff]
    %v269 = vld [vmem:[#allocation2 + $0x570] sm:$0xff]
    %v270 = vld [vmem:[#allocation2 + $0x578] sm:$0xff]
    %v271 = vld [vmem:[#allocation2 + $0x580] sm:$0xff]
    %v272 = vld [vmem:[#allocation2 + $0x588] sm:$0xff]
    %v273 = vld [vmem:[#allocation2 + $0x590] sm:$0xff]
    %v274 = vld [vmem:[#allocation2 + $0x598] sm:$0xff]
    %v275 = vld [vmem:[#allocation2 + $0x5a0] sm:$0xff]
    %v276 = vld [vmem:[#allocation2 + $0x5a8] sm:$0xff]
    %v277 = vld [vmem:[#allocation2 + $0x5b0] sm:$0xff]
    %v278 = vld [vmem:[#allocation2 + $0x5b8] sm:$0xff]
    %v279 = vld [vmem:[#allocation2 + $0x5c0] sm:$0xff]
    %v280 = vld [vmem:[#allocation2 + $0x5c8] sm:$0xff]
    %v281 = vld [vmem:[#allocation2 + $0x5d0] sm:$0xff]
    %v282 = vld [vmem:[#allocation2 + $0x5d8] sm:$0xff]
    %v283 = vld [vmem:[#allocation2 + $0x5e0] sm:$0xff]
    %v284 = vld [vmem:[#allocation2 + $0x5e8] sm:$0xff]
    %v285 = vld [vmem:[#allocation2 + $0x5f0] sm:$0xff]
    %v286 = vld [vmem:[#allocation2 + $0x5f8] sm:$0xff]
    %v287 = vld [vmem:[#allocation2 + $0x600] sm:$0xff]
    %v288 = vld [vmem:[#allocation2 + $0x608] sm:$0xff]
    %v289 = vld [vmem:[#allocation2 + $0x610] sm:$0xff]
    %v290 = vld [vmem:[#allocation2 + $0x618] sm:$0xff]
    %v291 = vld [vmem:[#allocation2 + $0x620] sm:$0xff]
    %v292 = vld [vmem:[#allocation2 + $0x628] sm:$0xff]
    %v293 = vld [vmem:[#allocation2 + $0x630] sm:$0xff]
    %v294 = vld [vmem:[#allocation2 + $0x638] sm:$0xff]
    %v295 = vld [vmem:[#allocation2 + $0x640] sm:$0xff]
    %v296 = vld [vmem:[#allocation2 + $0x648] sm:$0xff]
    %v297 = vld [vmem:[#allocation2 + $0x650] sm:$0xff]
    %v298 = vld [vmem:[#allocation2 + $0x658] sm:$0xff]
    %v299 = vld [vmem:[#allocation2 + $0x660] sm:$0xff]
    %v300 = vld [vmem:[#allocation2 + $0x668] sm:$0xff]
    %v301 = vld [vmem:[#allocation2 + $0x670] sm:$0xff]
    %v302 = vld [vmem:[#allocation2 + $0x678] sm:$0xff]
    %v303 = vld [vmem:[#allocation2 + $0x680] sm:$0xff]
    %v304 = vld [vmem:[#allocation2 + $0x688] sm:$0xff]
    %v305 = vld [vmem:[#allocation2 + $0x690] sm:$0xff]
    %v306 = vld [vmem:[#allocation2 + $0x698] sm:$0xff]
    %v307 = vld [vmem:[#allocation2 + $0x6a0] sm:$0xff]
    %v308 = vld [vmem:[#allocation2 + $0x6a8] sm:$0xff]
    %v309 = vld [vmem:[#allocation2 + $0x6b0] sm:$0xff]
    %v310 = vld [vmem:[#allocation2 + $0x6b8] sm:$0xff]
    %v311 = vld [vmem:[#allocation2 + $0x6c0] sm:$0xff]
    %v312 = vld [vmem:[#allocation2 + $0x6c8] sm:$0xff]
    %v313 = vld [vmem:[#allocation2 + $0x6d0] sm:$0xff]
    %v314 = vld [vmem:[#allocation2 + $0x6d8] sm:$0xff]
    %v315 = vld [vmem:[#allocation2 + $0x6e0] sm:$0xff]
    %v316 = vld [vmem:[#allocation2 + $0x6e8] sm:$0xff]
    %v317 = vld [vmem:[#allocation2 + $0x6f0] sm:$0xff]
    %v318 = vld [vmem:[#allocation2 + $0x6f8] sm:$0xff]
    %v319 = vld [vmem:[#allocation2 + $0x700] sm:$0xff]
    %v320 = vld [vmem:[#allocation2 + $0x708] sm:$0xff]
    %v321 = vld [vmem:[#allocation2 + $0x710] sm:$0xff]
    %v322 = vld [vmem:[#allocation2 + $0x718] sm:$0xff]
    %v323 = vld [vmem:[#allocation2 + $0x720] sm:$0xff]
    %v324 = vld [vmem:[#allocation2 + $0x728] sm:$0xff]
    %v325 = vld [vmem:[#allocation2 + $0x730] sm:$0xff]
    %v326 = vld [vmem:[#allocation2 + $0x738] sm:$0xff]
    %v327 = vld [vmem:[#allocation2 + $0x740] sm:$0xff]
    %v328 = vld [vmem:[#allocation2 + $0x748] sm:$0xff]
    %v329 = vld [vmem:[#allocation2 + $0x750] sm:$0xff]
    %v330 = vld [vmem:[#allocation2 + $0x758] sm:$0xff]
    %v331 = vld [vmem:[#allocation2 + $0x760] sm:$0xff]
    %v332 = vld [vmem:[#allocation2 + $0x768] sm:$0xff]
    %v333 = vld [vmem:[#allocation2 + $0x770] sm:$0xff]
    %v334 = vld [vmem:[#allocation2 + $0x778] sm:$0xff]
    %v335 = vld [vmem:[#allocation2 + $0x780] sm:$0xff]
    %v336 = vld [vmem:[#allocation2 + $0x788] sm:$0xff]
    %v337 = vld [vmem:[#allocation2 + $0x790] sm:$0xff]
    %v338 = vld [vmem:[#allocation2 + $0x798] sm:$0xff]
    %v339 = vld [vmem:[#allocation2 + $0x7a0] sm:$0xff]
    %v340 = vld [vmem:[#allocation2 + $0x7a8] sm:$0xff]
    %v341 = vld [vmem:[#allocation2 + $0x7b0] sm:$0xff]
    %v342 = vld [vmem:[#allocation2 + $0x7b8] sm:$0xff]
    %v343 = vld [vmem:[#allocation2 + $0x7c0] sm:$0xff]
    %v344 = vld [vmem:[#allocation2 + $0x7c8] sm:$0xff]
    %v345 = vld [vmem:[#allocation2 + $0x7d0] sm:$0xff]
    %v346 = vld [vmem:[#allocation2 + $0x7d8] sm:$0xff]
    %v347 = vld [vmem:[#allocation2 + $0x7e0] sm:$0xff]
    %v348 = vld [vmem:[#allocation2 + $0x7e8] sm:$0xff]
    %v349 = vld [vmem:[#allocation2 + $0x7f0] sm:$0xff]
    %v350 = vld [vmem:[#allocation2 + $0x7f8] sm:$0xff]
    %v351 = vld [vmem:[#allocation2 + $0x800] sm:$0xff]
    %v352 = vld [vmem:[#allocation2 + $0x808] sm:$0xff]
    %v353 = vld [vmem:[#allocation2 + $0x810] sm:$0xff]
    %v354 = vld [vmem:[#allocation2 + $0x818] sm:$0xff]
    %v355 = vld [vmem:[#allocation2 + $0x820] sm:$0xff]
    %v356 = vld [vmem:[#allocation2 + $0x828] sm:$0xff]
    %v357 = vld [vmem:[#allocation2 + $0x830] sm:$0xff]
    %v358 = vld [vmem:[#allocation2 + $0x838] sm:$0xff]
    %v359 = vld [vmem:[#allocation2 + $0x840] sm:$0xff]
    %v360 = vld [vmem:[#allocation2 + $0x848] sm:$0xff]
    %v361 = vld [vmem:[#allocation2 + $0x850] sm:$0xff]
    %v362 = vld [vmem:[#allocation2 + $0x858] sm:$0xff]
    %v363 = vld [vmem:[#allocation2 + $0x860] sm:$0xff]
    %v364 = vld [vmem:[#allocation2 + $0x868] sm:$0xff]
    %v365 = vld [vmem:[#allocation2 + $0x870] sm:$0xff]
    %v366 = vld [vmem:[#allocation2 + $0x878] sm:$0xff]
    %v367 = vld [vmem:[#allocation2 + $0x880] sm:$0xff]
    %v368 = vld [vmem:[#allocation2 + $0x888] sm:$0xff]
    %v369 = vld [vmem:[#allocation2 + $0x890] sm:$0xff]
    %v370 = vld [vmem:[#allocation2 + $0x898] sm:$0xff]
    %v371 = vld [vmem:[#allocation2 + $0x8a0] sm:$0xff]
    %v372 = vld [vmem:[#allocation2 + $0x8a8] sm:$0xff]
    %v373 = vld [vmem:[#allocation2 + $0x8b0] sm:$0xff]
    %v374 = vld [vmem:[#allocation2 + $0x8b8] sm:$0xff]
    %v375 = vld [vmem:[#allocation2 + $0x8c0] sm:$0xff]
    %v376 = vld [vmem:[#allocation2 + $0x8c8] sm:$0xff]
    %v377 = vld [vmem:[#allocation2 + $0x8d0] sm:$0xff]
    %v378 = vld [vmem:[#allocation2 + $0x8d8] sm:$0xff]
    %v379 = vld [vmem:[#allocation2 + $0x8e0] sm:$0xff]
    %v380 = vld [vmem:[#allocation2 + $0x8e8] sm:$0xff]
    %v381 = vld [vmem:[#allocation2 + $0x8f0] sm:$0xff]
    %v382 = vld [vmem:[#allocation2 + $0x8f8] sm:$0xff]
    %v383 = vld [vmem:[#allocation2 + $0x900] sm:$0xff]
    %v384 = vld [vmem:[#allocation2 + $0x908] sm:$0xff]
    %v385 = vld [vmem:[#allocation2 + $0x910] sm:$0xff]
    %v386 = vld [vmem:[#allocation2 + $0x918] sm:$0xff]
    %v387 = vld [vmem:[#allocation2 + $0x920] sm:$0xff]
    %v388 = vld [vmem:[#allocation2 + $0x928] sm:$0xff]
    %v389 = vld [vmem:[#allocation2 + $0x930] sm:$0xff]
    %v390 = vld [vmem:[#allocation2 + $0x938] sm:$0xff]
    %v391 = vld [vmem:[#allocation2 + $0x940] sm:$0xff]
    %v392 = vld [vmem:[#allocation2 + $0x948] sm:$0xff]
    %v393 = vld [vmem:[#allocation2 + $0x950] sm:$0xff]
    %v394 = vld [vmem:[#allocation2 + $0x958] sm:$0xff]
    %v395 = vld [vmem:[#allocation2 + $0x960] sm:$0xff]
    %v396 = vld [vmem:[#allocation2 + $0x968] sm:$0xff]
    %v397 = vld [vmem:[#allocation2 + $0x970] sm:$0xff]
    %v398 = vld [vmem:[#allocation2 + $0x978] sm:$0xff]
    %v399 = vld [vmem:[#allocation2 + $0x980] sm:$0xff]
    %v400 = vld [vmem:[#allocation2 + $0x988] sm:$0xff]
    %v401 = vld [vmem:[#allocation2 + $0x990] sm:$0xff]
    %v402 = vld [vmem:[#allocation2 + $0x998] sm:$0xff]
    %v403 = vld [vmem:[#allocation2 + $0x9a0] sm:$0xff]
    %v404 = vld [vmem:[#allocation2 + $0x9a8] sm:$0xff]
    %v405 = vld [vmem:[#allocation2 + $0x9b0] sm:$0xff]
    %v406 = vld [vmem:[#allocation2 + $0x9b8] sm:$0xff]
    %v407 = vld [vmem:[#allocation2 + $0x9c0] sm:$0xff]
    %v408 = vld [vmem:[#allocation2 + $0x9c8] sm:$0xff]
    %v409 = vld [vmem:[#allocation2 + $0x9d0] sm:$0xff]
    %v410 = vld [vmem:[#allocation2 + $0x9d8] sm:$0xff]
    %v411 = vld [vmem:[#allocation2 + $0x9e0] sm:$0xff]
    %v412 = vld [vmem:[#allocation2 + $0x9e8] sm:$0xff]
    %v413 = vld [vmem:[#allocation2 + $0x9f0] sm:$0xff]
    %v414 = vld [vmem:[#allocation2 + $0x9f8] sm:$0xff]
    %v415 = vld [vmem:[#allocation2 + $0xa00] sm:$0xff]
    %v416 = vld [vmem:[#allocation2 + $0xa08] sm:$0xff]
    %v417 = vld [vmem:[#allocation2 + $0xa10] sm:$0xff]
    %v418 = vld [vmem:[#allocation2 + $0xa18] sm:$0xff]
    %v419 = vld [vmem:[#allocation2 + $0xa20] sm:$0xff]
    %v420 = vld [vmem:[#allocation2 + $0xa28] sm:$0xff]
    %v421 = vld [vmem:[#allocation2 + $0xa30] sm:$0xff]
    %v422 = vld [vmem:[#allocation2 + $0xa38] sm:$0xff]
    %v423 = vld [vmem:[#allocation2 + $0xa40] sm:$0xff]
    %v424 = vld [vmem:[#allocation2 + $0xa48] sm:$0xff]
    %v425 = vld [vmem:[#allocation2 + $0xa50] sm:$0xff]
    %v426 = vld [vmem:[#allocation2 + $0xa58] sm:$0xff]
    %v427 = vld [vmem:[#allocation2 + $0xa60] sm:$0xff]
    %v428 = vld [vmem:[#allocation2 + $0xa68] sm:$0xff]
    %v429 = vld [vmem:[#allocation2 + $0xa70] sm:$0xff]
    %v430 = vld [vmem:[#allocation2 + $0xa78] sm:$0xff]
    %v431 = vld [vmem:[#allocation2 + $0xa80] sm:$0xff]
    %v432 = vld [vmem:[#allocation2 + $0xa88] sm:$0xff]
    %v433 = vld [vmem:[#allocation2 + $0xa90] sm:$0xff]
    %v434 = vld [vmem:[#allocation2 + $0xa98] sm:$0xff]
    %v435 = vld [vmem:[#allocation2 + $0xaa0] sm:$0xff]
    %v436 = vld [vmem:[#allocation2 + $0xaa8] sm:$0xff]
    %v437 = vld [vmem:[#allocation2 + $0xab0] sm:$0xff]
    %v438 = vld [vmem:[#allocation2 + $0xab8] sm:$0xff]
    %v439 = vld [vmem:[#allocation2 + $0xac0] sm:$0xff]
    %v440 = vld [vmem:[#allocation2 + $0xac8] sm:$0xff]
    %v441 = vld [vmem:[#allocation2 + $0xad0] sm:$0xff]
    %v442 = vld [vmem:[#allocation2 + $0xad8] sm:$0xff]
    %v443 = vld [vmem:[#allocation2 + $0xae0] sm:$0xff]
    %v444 = vld [vmem:[#allocation2 + $0xae8] sm:$0xff]
    %v445 = vld [vmem:[#allocation2 + $0xaf0] sm:$0xff]
    %v446 = vld [vmem:[#allocation2 + $0xaf8] sm:$0xff]
    %v447 = vld [vmem:[#allocation2 + $0xb00] sm:$0xff]
    %v448 = vld [vmem:[#allocation2 + $0xb08] sm:$0xff]
    %v449 = vld [vmem:[#allocation2 + $0xb10] sm:$0xff]
    %v450 = vld [vmem:[#allocation2 + $0xb18] sm:$0xff]
    %v451 = vld [vmem:[#allocation2 + $0xb20] sm:$0xff]
    %v452 = vld [vmem:[#allocation2 + $0xb28] sm:$0xff]
    %v453 = vld [vmem:[#allocation2 + $0xb30] sm:$0xff]
    %v454 = vld [vmem:[#allocation2 + $0xb38] sm:$0xff]
    %v455 = vld [vmem:[#allocation2 + $0xb40] sm:$0xff]
    %v456 = vld [vmem:[#allocation2 + $0xb48] sm:$0xff]
    %v457 = vld [vmem:[#allocation2 + $0xb50] sm:$0xff]
    %v458 = vld [vmem:[#allocation2 + $0xb58] sm:$0xff]
    %v459 = vld [vmem:[#allocation2 + $0xb60] sm:$0xff]
    %v460 = vld [vmem:[#allocation2 + $0xb68] sm:$0xff]
    %v461 = vld [vmem:[#allocation2 + $0xb70] sm:$0xff]
    %v462 = vld [vmem:[#allocation2 + $0xb78] sm:$0xff]
    %v463 = vld [vmem:[#allocation2 + $0xb80] sm:$0xff]
    %v464 = vld [vmem:[#allocation2 + $0xb88] sm:$0xff]
    %v465 = vld [vmem:[#allocation2 + $0xb90] sm:$0xff]
    %v466 = vld [vmem:[#allocation2 + $0xb98] sm:$0xff]
    %v467 = vld [vmem:[#allocation2 + $0xba0] sm:$0xff]
    %v468 = vld [vmem:[#allocation2 + $0xba8] sm:$0xff]
    %v469 = vld [vmem:[#allocation2 + $0xbb0] sm:$0xff]
    %v470 = vld [vmem:[#allocation2 + $0xbb8] sm:$0xff]
    %v471 = vld [vmem:[#allocation2 + $0xbc0] sm:$0xff]
    %v472 = vld [vmem:[#allocation2 + $0xbc8] sm:$0xff]
    %v473 = vld [vmem:[#allocation2 + $0xbd0] sm:$0xff]
    %v474 = vld [vmem:[#allocation2 + $0xbd8] sm:$0xff]
    %v475 = vld [vmem:[#allocation2 + $0xbe0] sm:$0xff]
    %v476 = vld [vmem:[#allocation2 + $0xbe8] sm:$0xff]
    %v477 = vld [vmem:[#allocation2 + $0xbf0] sm:$0xff]
    %v478 = vld [vmem:[#allocation2 + $0xbf8] sm:$0xff]
    %v479 = vld [vmem:[#allocation4] sm:$0x1]
    %v481 = vlaneseq
    %v482 = vshrl.u32 %v481, 7
    %v483 = vsub.s32 0, %v482
    %v484 = vrot.slane %v479, %v483
    %486 = vmatprep.subr.mxu0 0.0
    %487 = vmatpush1.msra.mxu0 %v110
    %488 = vmatprep.subr.mxu0 0.0
    %489 = vmatpush1.msra.mxu0 %v109
    %490 = vmatprep.subr.mxu0 0.0
    %491 = vmatpush1.msra.mxu0 %v108
    %492 = vmatprep.subr.mxu0 0.0
    %493 = vmatpush1.msra.mxu0 %v107
    %494 = vmatprep.subr.mxu0 0.0
    %495 = vmatpush1.msra.mxu0 %v106
    %496 = vmatprep.subr.mxu0 0.0
    %497 = vmatpush1.msra.mxu0 %v105
    %498 = vmatprep.subr.mxu0 0.0
    %499 = vmatpush1.msra.mxu0 %v104
    %500 = vmatprep.subr.mxu0 0.0
    %501 = vmatpush1.msra.mxu0 %v103
    %502 = vmatprep.subr.mxu0 0.0
    %503 = vmatpush1.msra.mxu0 %v102
    %504 = vmatprep.subr.mxu0 0.0
    %505 = vmatpush1.msra.mxu0 %v101
    %506 = vmatprep.subr.mxu0 0.0
    %507 = vmatpush1.msra.mxu0 %v100
    %508 = vmatprep.subr.mxu0 0.0
    %509 = vmatpush1.msra.mxu0 %v99
    %510 = vmatprep.subr.mxu0 0.0
    %511 = vmatpush1.msra.mxu0 %v98
    %512 = vmatprep.subr.mxu0 0.0
    %513 = vmatpush1.msra.mxu0 %v97
    %514 = vmatprep.subr.mxu0 0.0
    %515 = vmatpush1.msra.mxu0 %v96
    %516 = vmatprep.subr.mxu0 0.0
    %517 = vmatpush1.msra.mxu0 %v95
    %518 = vmatprep.subr.mxu0 0.0
    %519 = vmatpush2.msra.mxu0 %v126
    %520 = vmatprep.subr.mxu0 0.0
    %521 = vmatpush2.msra.mxu0 %v125
    %522 = vmatprep.subr.mxu0 0.0
    %523 = vmatpush2.msra.mxu0 %v124
    %524 = vmatprep.subr.mxu0 0.0
    %525 = vmatpush2.msra.mxu0 %v123
    %526 = vmatprep.subr.mxu0 0.0
    %527 = vmatpush2.msra.mxu0 %v122
    %528 = vmatprep.subr.mxu0 0.0
    %529 = vmatpush2.msra.mxu0 %v121
    %530 = vmatprep.subr.mxu0 0.0
    %531 = vmatpush2.msra.mxu0 %v120
    %532 = vmatprep.subr.mxu0 0.0
    %533 = vmatpush2.msra.mxu0 %v119
    %534 = vmatprep.subr.mxu0 0.0
    %535 = vmatpush2.msra.mxu0 %v118
    %536 = vmatprep.subr.mxu0 0.0
    %537 = vmatpush2.msra.mxu0 %v117
    %538 = vmatprep.subr.mxu0 0.0
    %539 = vmatpush2.msra.mxu0 %v116
    %540 = vmatprep.subr.mxu0 0.0
    %541 = vmatpush2.msra.mxu0 %v115
    %542 = vmatprep.subr.mxu0 0.0
    %543 = vmatpush2.msra.mxu0 %v114
    %544 = vmatprep.subr.mxu0 0.0
    %545 = vmatpush2.msra.mxu0 %v113
    %546 = vmatprep.subr.mxu0 0.0
    %547 = vmatpush2.msra.mxu0 %v112
    %548 = vmatprep.subr.mxu0 0.0
    %549 = vmatpush2.msra.mxu0 %v111
    %550 = vmatprep.mubr.f32.mxu0 %v72
    %551 = vmatmul.mubr.f32.gmra.mxu0 %v71
    %v552 = vpop.f32.mrf.mxu0
    %v553 = vadd.f32 %v484, %v552
    %v554 = vpop.f32.mrf.mxu0
    %555 = vdwg.mxu0
    %556 = vmatprep.subr.mxu0 0.0
    %557 = vmatpush1.msra.mxu0 %v142
    %558 = vmatprep.subr.mxu0 0.0
    %559 = vmatpush1.msra.mxu0 %v141
    %560 = vmatprep.subr.mxu0 0.0
    %561 = vmatpush1.msra.mxu0 %v140
    %562 = vmatprep.subr.mxu0 0.0
    %563 = vmatpush1.msra.mxu0 %v139
    %564 = vmatprep.subr.mxu0 0.0
    %565 = vmatpush1.msra.mxu0 %v138
    %566 = vmatprep.subr.mxu0 0.0
    %567 = vmatpush1.msra.mxu0 %v137
    %568 = vmatprep.subr.mxu0 0.0
    %569 = vmatpush1.msra.mxu0 %v136
    %570 = vmatprep.subr.mxu0 0.0
    %571 = vmatpush1.msra.mxu0 %v135
    %572 = vmatprep.subr.mxu0 0.0
    %573 = vmatpush1.msra.mxu0 %v134
    %574 = vmatprep.subr.mxu0 0.0
    %575 = vmatpush1.msra.mxu0 %v133
    %576 = vmatprep.subr.mxu0 0.0
    %577 = vmatpush1.msra.mxu0 %v132
    %578 = vmatprep.subr.mxu0 0.0
    %579 = vmatpush1.msra.mxu0 %v131
    %580 = vmatprep.subr.mxu0 0.0
    %581 = vmatpush1.msra.mxu0 %v130
    %582 = vmatprep.subr.mxu0 0.0
    %583 = vmatpush1.msra.mxu0 %v129
    %584 = vmatprep.subr.mxu0 0.0
    %585 = vmatpush1.msra.mxu0 %v128
    %586 = vmatprep.subr.mxu0 0.0
    %587 = vmatpush1.msra.mxu0 %v127
    %588 = vmatprep.subr.mxu0 0.0
    %589 = vmatpush2.msra.mxu0 %v158
    %590 = vmatprep.subr.mxu0 0.0
    %591 = vmatpush2.msra.mxu0 %v157
    %592 = vmatprep.subr.mxu0 0.0
    %593 = vmatpush2.msra.mxu0 %v156
    %594 = vmatprep.subr.mxu0 0.0
    %595 = vmatpush2.msra.mxu0 %v155
    %596 = vmatprep.subr.mxu0 0.0
    %597 = vmatpush2.msra.mxu0 %v154
    %598 = vmatprep.subr.mxu0 0.0
    %599 = vmatpush2.msra.mxu0 %v153
    %600 = vmatprep.subr.mxu0 0.0
    %601 = vmatpush2.msra.mxu0 %v152
    %602 = vmatprep.subr.mxu0 0.0
    %603 = vmatpush2.msra.mxu0 %v151
    %604 = vmatprep.subr.mxu0 0.0
    %605 = vmatpush2.msra.mxu0 %v150
    %606 = vmatprep.subr.mxu0 0.0
    %607 = vmatpush2.msra.mxu0 %v149
    %608 = vmatprep.subr.mxu0 0.0
    %609 = vmatpush2.msra.mxu0 %v148
    %610 = vmatprep.subr.mxu0 0.0
    %611 = vmatpush2.msra.mxu0 %v147
    %612 = vmatprep.subr.mxu0 0.0
    %613 = vmatpush2.msra.mxu0 %v146
    %614 = vmatprep.subr.mxu0 0.0
    %615 = vmatpush2.msra.mxu0 %v145
    %616 = vmatprep.subr.mxu0 0.0
    %617 = vmatpush2.msra.mxu0 %v144
    %618 = vmatprep.subr.mxu0 0.0
    %619 = vmatpush2.msra.mxu0 %v143
    %620 = vmatprep.mubr.f32.mxu0 %v74
    %621 = vmatmul.mubr.f32.gmra.mxu0 %v73
    %v622 = vpop.f32.mrf.mxu0
    %v623 = vadd.f32 %v553, %v622
    %v624 = vpop.f32.mrf.mxu0
    %625 = vdwg.mxu0
    %626 = vmatprep.subr.mxu0 0.0
    %627 = vmatpush1.msra.mxu0 %v174
    %628 = vmatprep.subr.mxu0 0.0
    %629 = vmatpush1.msra.mxu0 %v173
    %630 = vmatprep.subr.mxu0 0.0
    %631 = vmatpush1.msra.mxu0 %v172
    %632 = vmatprep.subr.mxu0 0.0
    %633 = vmatpush1.msra.mxu0 %v171
    %634 = vmatprep.subr.mxu0 0.0
    %635 = vmatpush1.msra.mxu0 %v170
    %636 = vmatprep.subr.mxu0 0.0
    %637 = vmatpush1.msra.mxu0 %v169
    %638 = vmatprep.subr.mxu0 0.0
    %639 = vmatpush1.msra.mxu0 %v168
    %640 = vmatprep.subr.mxu0 0.0
    %641 = vmatpush1.msra.mxu0 %v167
    %642 = vmatprep.subr.mxu0 0.0
    %643 = vmatpush1.msra.mxu0 %v166
    %644 = vmatprep.subr.mxu0 0.0
    %645 = vmatpush1.msra.mxu0 %v165
    %646 = vmatprep.subr.mxu0 0.0
    %647 = vmatpush1.msra.mxu0 %v164
    %648 = vmatprep.subr.mxu0 0.0
    %649 = vmatpush1.msra.mxu0 %v163
    %650 = vmatprep.subr.mxu0 0.0
    %651 = vmatpush1.msra.mxu0 %v162
    %652 = vmatprep.subr.mxu0 0.0
    %653 = vmatpush1.msra.mxu0 %v161
    %654 = vmatprep.subr.mxu0 0.0
    %655 = vmatpush1.msra.mxu0 %v160
    %656 = vmatprep.subr.mxu0 0.0
    %657 = vmatpush1.msra.mxu0 %v159
    %658 = vmatprep.subr.mxu0 0.0
    %659 = vmatpush2.msra.mxu0 %v190
    %660 = vmatprep.subr.mxu0 0.0
    %661 = vmatpush2.msra.mxu0 %v189
    %662 = vmatprep.subr.mxu0 0.0
    %663 = vmatpush2.msra.mxu0 %v188
    %664 = vmatprep.subr.mxu0 0.0
    %665 = vmatpush2.msra.mxu0 %v187
    %666 = vmatprep.subr.mxu0 0.0
    %667 = vmatpush2.msra.mxu0 %v186
    %668 = vmatprep.subr.mxu0 0.0
    %669 = vmatpush2.msra.mxu0 %v185
    %670 = vmatprep.subr.mxu0 0.0
    %671 = vmatpush2.msra.mxu0 %v184
    %672 = vmatprep.subr.mxu0 0.0
    %673 = vmatpush2.msra.mxu0 %v183
    %674 = vmatprep.subr.mxu0 0.0
    %675 = vmatpush2.msra.mxu0 %v182
    %676 = vmatprep.subr.mxu0 0.0
    %677 = vmatpush2.msra.mxu0 %v181
    %678 = vmatprep.subr.mxu0 0.0
    %679 = vmatpush2.msra.mxu0 %v180
    %680 = vmatprep.subr.mxu0 0.0
    %681 = vmatpush2.msra.mxu0 %v179
    %682 = vmatprep.subr.mxu0 0.0
    %683 = vmatpush2.msra.mxu0 %v178
    %684 = vmatprep.subr.mxu0 0.0
    %685 = vmatpush2.msra.mxu0 %v177
    %686 = vmatprep.subr.mxu0 0.0
    %687 = vmatpush2.msra.mxu0 %v176
    %688 = vmatprep.subr.mxu0 0.0
    %689 = vmatpush2.msra.mxu0 %v175
    %690 = vmatprep.mubr.f32.mxu0 %v76
    %691 = vmatmul.mubr.f32.gmra.mxu0 %v75
    %v692 = vpop.f32.mrf.mxu0
    %v693 = vadd.f32 %v623, %v692
    %v694 = vpop.f32.mrf.mxu0
    %695 = vdwg.mxu0
    %696 = vmatprep.subr.mxu0 0.0
    %697 = vmatpush1.msra.mxu0 %v206
    %698 = vmatprep.subr.mxu0 0.0
    %699 = vmatpush1.msra.mxu0 %v205
    %700 = vmatprep.subr.mxu0 0.0
    %701 = vmatpush1.msra.mxu0 %v204
    %702 = vmatprep.subr.mxu0 0.0
    %703 = vmatpush1.msra.mxu0 %v203
    %704 = vmatprep.subr.mxu0 0.0
    %705 = vmatpush1.msra.mxu0 %v202
    %706 = vmatprep.subr.mxu0 0.0
    %707 = vmatpush1.msra.mxu0 %v201
    %708 = vmatprep.subr.mxu0 0.0
    %709 = vmatpush1.msra.mxu0 %v200
    %710 = vmatprep.subr.mxu0 0.0
    %711 = vmatpush1.msra.mxu0 %v199
    %712 = vmatprep.subr.mxu0 0.0
    %713 = vmatpush1.msra.mxu0 %v198
    %714 = vmatprep.subr.mxu0 0.0
    %715 = vmatpush1.msra.mxu0 %v197
    %716 = vmatprep.subr.mxu0 0.0
    %717 = vmatpush1.msra.mxu0 %v196
    %718 = vmatprep.subr.mxu0 0.0
    %719 = vmatpush1.msra.mxu0 %v195
    %720 = vmatprep.subr.mxu0 0.0
    %721 = vmatpush1.msra.mxu0 %v194
    %722 = vmatprep.subr.mxu0 0.0
    %723 = vmatpush1.msra.mxu0 %v193
    %724 = vmatprep.subr.mxu0 0.0
    %725 = vmatpush1.msra.mxu0 %v192
    %726 = vmatprep.subr.mxu0 0.0
    %727 = vmatpush1.msra.mxu0 %v191
    %728 = vmatprep.subr.mxu0 0.0
    %729 = vmatpush2.msra.mxu0 %v222
    %730 = vmatprep.subr.mxu0 0.0
    %731 = vmatpush2.msra.mxu0 %v221
    %732 = vmatprep.subr.mxu0 0.0
    %733 = vmatpush2.msra.mxu0 %v220
    %734 = vmatprep.subr.mxu0 0.0
    %735 = vmatpush2.msra.mxu0 %v219
    %736 = vmatprep.subr.mxu0 0.0
    %737 = vmatpush2.msra.mxu0 %v218
    %738 = vmatprep.subr.mxu0 0.0
    %739 = vmatpush2.msra.mxu0 %v217
    %740 = vmatprep.subr.mxu0 0.0
    %741 = vmatpush2.msra.mxu0 %v216
    %742 = vmatprep.subr.mxu0 0.0
    %743 = vmatpush2.msra.mxu0 %v215
    %744 = vmatprep.subr.mxu0 0.0
    %745 = vmatpush2.msra.mxu0 %v214
    %746 = vmatprep.subr.mxu0 0.0
    %747 = vmatpush2.msra.mxu0 %v213
    %748 = vmatprep.subr.mxu0 0.0
    %749 = vmatpush2.msra.mxu0 %v212
    %750 = vmatprep.subr.mxu0 0.0
    %751 = vmatpush2.msra.mxu0 %v211
    %752 = vmatprep.subr.mxu0 0.0
    %753 = vmatpush2.msra.mxu0 %v210
    %754 = vmatprep.subr.mxu0 0.0
    %755 = vmatpush2.msra.mxu0 %v209
    %756 = vmatprep.subr.mxu0 0.0
    %757 = vmatpush2.msra.mxu0 %v208
    %758 = vmatprep.subr.mxu0 0.0
    %759 = vmatpush2.msra.mxu0 %v207
    %760 = vmatprep.mubr.f32.mxu0 %v78
    %761 = vmatmul.mubr.f32.gmra.mxu0 %v77
    %v762 = vpop.f32.mrf.mxu0
    %v763 = vadd.f32 %v693, %v762
    %v764 = vpop.f32.mrf.mxu0
    %765 = vdwg.mxu0
    %766 = vmatprep.subr.mxu0 0.0
    %767 = vmatpush1.msra.mxu0 %v238
    %768 = vmatprep.subr.mxu0 0.0
    %769 = vmatpush1.msra.mxu0 %v237
    %770 = vmatprep.subr.mxu0 0.0
    %771 = vmatpush1.msra.mxu0 %v236
    %772 = vmatprep.subr.mxu0 0.0
    %773 = vmatpush1.msra.mxu0 %v235
    %774 = vmatprep.subr.mxu0 0.0
    %775 = vmatpush1.msra.mxu0 %v234
    %776 = vmatprep.subr.mxu0 0.0
    %777 = vmatpush1.msra.mxu0 %v233
    %778 = vmatprep.subr.mxu0 0.0
    %779 = vmatpush1.msra.mxu0 %v232
    %780 = vmatprep.subr.mxu0 0.0
    %781 = vmatpush1.msra.mxu0 %v231
    %782 = vmatprep.subr.mxu0 0.0
    %783 = vmatpush1.msra.mxu0 %v230
    %784 = vmatprep.subr.mxu0 0.0
    %785 = vmatpush1.msra.mxu0 %v229
    %786 = vmatprep.subr.mxu0 0.0
    %787 = vmatpush1.msra.mxu0 %v228
    %788 = vmatprep.subr.mxu0 0.0
    %789 = vmatpush1.msra.mxu0 %v227
    %790 = vmatprep.subr.mxu0 0.0
    %791 = vmatpush1.msra.mxu0 %v226
    %792 = vmatprep.subr.mxu0 0.0
    %793 = vmatpush1.msra.mxu0 %v225
    %794 = vmatprep.subr.mxu0 0.0
    %795 = vmatpush1.msra.mxu0 %v224
    %796 = vmatprep.subr.mxu0 0.0
    %797 = vmatpush1.msra.mxu0 %v223
    %798 = vmatprep.subr.mxu0 0.0
    %799 = vmatpush2.msra.mxu0 %v254
    %800 = vmatprep.subr.mxu0 0.0
    %801 = vmatpush2.msra.mxu0 %v253
    %802 = vmatprep.subr.mxu0 0.0
    %803 = vmatpush2.msra.mxu0 %v252
    %804 = vmatprep.subr.mxu0 0.0
    %805 = vmatpush2.msra.mxu0 %v251
    %806 = vmatprep.subr.mxu0 0.0
    %807 = vmatpush2.msra.mxu0 %v250
    %808 = vmatprep.subr.mxu0 0.0
    %809 = vmatpush2.msra.mxu0 %v249
    %810 = vmatprep.subr.mxu0 0.0
    %811 = vmatpush2.msra.mxu0 %v248
    %812 = vmatprep.subr.mxu0 0.0
    %813 = vmatpush2.msra.mxu0 %v247
    %814 = vmatprep.subr.mxu0 0.0
    %815 = vmatpush2.msra.mxu0 %v246
    %816 = vmatprep.subr.mxu0 0.0
    %817 = vmatpush2.msra.mxu0 %v245
    %818 = vmatprep.subr.mxu0 0.0
    %819 = vmatpush2.msra.mxu0 %v244
    %820 = vmatprep.subr.mxu0 0.0
    %821 = vmatpush2.msra.mxu0 %v243
    %822 = vmatprep.subr.mxu0 0.0
    %823 = vmatpush2.msra.mxu0 %v242
    %824 = vmatprep.subr.mxu0 0.0
    %825 = vmatpush2.msra.mxu0 %v241
    %826 = vmatprep.subr.mxu0 0.0
    %827 = vmatpush2.msra.mxu0 %v240
    %828 = vmatprep.subr.mxu0 0.0
    %829 = vmatpush2.msra.mxu0 %v239
    %830 = vmatprep.mubr.f32.mxu0 %v80
    %831 = vmatmul.mubr.f32.gmra.mxu0 %v79
    %v832 = vpop.f32.mrf.mxu0
    %v833 = vadd.f32 %v763, %v832
    %v834 = vpop.f32.mrf.mxu0
    %835 = vdwg.mxu0
    %836 = vmatprep.subr.mxu0 0.0
    %837 = vmatpush1.msra.mxu0 %v270
    %838 = vmatprep.subr.mxu0 0.0
    %839 = vmatpush1.msra.mxu0 %v269
    %840 = vmatprep.subr.mxu0 0.0
    %841 = vmatpush1.msra.mxu0 %v268
    %842 = vmatprep.subr.mxu0 0.0
    %843 = vmatpush1.msra.mxu0 %v267
    %844 = vmatprep.subr.mxu0 0.0
    %845 = vmatpush1.msra.mxu0 %v266
    %846 = vmatprep.subr.mxu0 0.0
    %847 = vmatpush1.msra.mxu0 %v265
    %848 = vmatprep.subr.mxu0 0.0
    %849 = vmatpush1.msra.mxu0 %v264
    %850 = vmatprep.subr.mxu0 0.0
    %851 = vmatpush1.msra.mxu0 %v263
    %852 = vmatprep.subr.mxu0 0.0
    %853 = vmatpush1.msra.mxu0 %v262
    %854 = vmatprep.subr.mxu0 0.0
    %855 = vmatpush1.msra.mxu0 %v261
    %856 = vmatprep.subr.mxu0 0.0
    %857 = vmatpush1.msra.mxu0 %v260
    %858 = vmatprep.subr.mxu0 0.0
    %859 = vmatpush1.msra.mxu0 %v259
    %860 = vmatprep.subr.mxu0 0.0
    %861 = vmatpush1.msra.mxu0 %v258
    %862 = vmatprep.subr.mxu0 0.0
    %863 = vmatpush1.msra.mxu0 %v257
    %864 = vmatprep.subr.mxu0 0.0
    %865 = vmatpush1.msra.mxu0 %v256
    %866 = vmatprep.subr.mxu0 0.0
    %867 = vmatpush1.msra.mxu0 %v255
    %868 = vmatprep.subr.mxu0 0.0
    %869 = vmatpush2.msra.mxu0 %v286
    %870 = vmatprep.subr.mxu0 0.0
    %871 = vmatpush2.msra.mxu0 %v285
    %872 = vmatprep.subr.mxu0 0.0
    %873 = vmatpush2.msra.mxu0 %v284
    %874 = vmatprep.subr.mxu0 0.0
    %875 = vmatpush2.msra.mxu0 %v283
    %876 = vmatprep.subr.mxu0 0.0
    %877 = vmatpush2.msra.mxu0 %v282
    %878 = vmatprep.subr.mxu0 0.0
    %879 = vmatpush2.msra.mxu0 %v281
    %880 = vmatprep.subr.mxu0 0.0
    %881 = vmatpush2.msra.mxu0 %v280
    %882 = vmatprep.subr.mxu0 0.0
    %883 = vmatpush2.msra.mxu0 %v279
    %884 = vmatprep.subr.mxu0 0.0
    %885 = vmatpush2.msra.mxu0 %v278
    %886 = vmatprep.subr.mxu0 0.0
    %887 = vmatpush2.msra.mxu0 %v277
    %888 = vmatprep.subr.mxu0 0.0
    %889 = vmatpush2.msra.mxu0 %v276
    %890 = vmatprep.subr.mxu0 0.0
    %891 = vmatpush2.msra.mxu0 %v275
    %892 = vmatprep.subr.mxu0 0.0
    %893 = vmatpush2.msra.mxu0 %v274
    %894 = vmatprep.subr.mxu0 0.0
    %895 = vmatpush2.msra.mxu0 %v273
    %896 = vmatprep.subr.mxu0 0.0
    %897 = vmatpush2.msra.mxu0 %v272
    %898 = vmatprep.subr.mxu0 0.0
    %899 = vmatpush2.msra.mxu0 %v271
    %900 = vmatprep.mubr.f32.mxu0 %v82
    %901 = vmatmul.mubr.f32.gmra.mxu0 %v81
    %v902 = vpop.f32.mrf.mxu0
    %v903 = vadd.f32 %v833, %v902
    %v904 = vpop.f32.mrf.mxu0
    %905 = vdwg.mxu0
    %906 = vmatprep.subr.mxu0 0.0
    %907 = vmatpush1.msra.mxu0 %v302
    %908 = vmatprep.subr.mxu0 0.0
    %909 = vmatpush1.msra.mxu0 %v301
    %910 = vmatprep.subr.mxu0 0.0
    %911 = vmatpush1.msra.mxu0 %v300
    %912 = vmatprep.subr.mxu0 0.0
    %913 = vmatpush1.msra.mxu0 %v299
    %914 = vmatprep.subr.mxu0 0.0
    %915 = vmatpush1.msra.mxu0 %v298
    %916 = vmatprep.subr.mxu0 0.0
    %917 = vmatpush1.msra.mxu0 %v297
    %918 = vmatprep.subr.mxu0 0.0
    %919 = vmatpush1.msra.mxu0 %v296
    %920 = vmatprep.subr.mxu0 0.0
    %921 = vmatpush1.msra.mxu0 %v295
    %922 = vmatprep.subr.mxu0 0.0
    %923 = vmatpush1.msra.mxu0 %v294
    %924 = vmatprep.subr.mxu0 0.0
    %925 = vmatpush1.msra.mxu0 %v293
    %926 = vmatprep.subr.mxu0 0.0
    %927 = vmatpush1.msra.mxu0 %v292
    %928 = vmatprep.subr.mxu0 0.0
    %929 = vmatpush1.msra.mxu0 %v291
    %930 = vmatprep.subr.mxu0 0.0
    %931 = vmatpush1.msra.mxu0 %v290
    %932 = vmatprep.subr.mxu0 0.0
    %933 = vmatpush1.msra.mxu0 %v289
    %934 = vmatprep.subr.mxu0 0.0
    %935 = vmatpush1.msra.mxu0 %v288
    %936 = vmatprep.subr.mxu0 0.0
    %937 = vmatpush1.msra.mxu0 %v287
    %938 = vmatprep.subr.mxu0 0.0
    %939 = vmatpush2.msra.mxu0 %v318
    %940 = vmatprep.subr.mxu0 0.0
    %941 = vmatpush2.msra.mxu0 %v317
    %942 = vmatprep.subr.mxu0 0.0
    %943 = vmatpush2.msra.mxu0 %v316
    %944 = vmatprep.subr.mxu0 0.0
    %945 = vmatpush2.msra.mxu0 %v315
    %946 = vmatprep.subr.mxu0 0.0
    %947 = vmatpush2.msra.mxu0 %v314
    %948 = vmatprep.subr.mxu0 0.0
    %949 = vmatpush2.msra.mxu0 %v313
    %950 = vmatprep.subr.mxu0 0.0
    %951 = vmatpush2.msra.mxu0 %v312
    %952 = vmatprep.subr.mxu0 0.0
    %953 = vmatpush2.msra.mxu0 %v311
    %954 = vmatprep.subr.mxu0 0.0
    %955 = vmatpush2.msra.mxu0 %v310
    %956 = vmatprep.subr.mxu0 0.0
    %957 = vmatpush2.msra.mxu0 %v309
    %958 = vmatprep.subr.mxu0 0.0
    %959 = vmatpush2.msra.mxu0 %v308
    %960 = vmatprep.subr.mxu0 0.0
    %961 = vmatpush2.msra.mxu0 %v307
    %962 = vmatprep.subr.mxu0 0.0
    %963 = vmatpush2.msra.mxu0 %v306
    %964 = vmatprep.subr.mxu0 0.0
    %965 = vmatpush2.msra.mxu0 %v305
    %966 = vmatprep.subr.mxu0 0.0
    %967 = vmatpush2.msra.mxu0 %v304
    %968 = vmatprep.subr.mxu0 0.0
    %969 = vmatpush2.msra.mxu0 %v303
    %970 = vmatprep.mubr.f32.mxu0 %v84
    %971 = vmatmul.mubr.f32.gmra.mxu0 %v83
    %v972 = vpop.f32.mrf.mxu0
    %v973 = vadd.f32 %v903, %v972
    %v974 = vpop.f32.mrf.mxu0
    %975 = vdwg.mxu0
    %976 = vmatprep.subr.mxu0 0.0
    %977 = vmatpush1.msra.mxu0 %v334
    %978 = vmatprep.subr.mxu0 0.0
    %979 = vmatpush1.msra.mxu0 %v333
    %980 = vmatprep.subr.mxu0 0.0
    %981 = vmatpush1.msra.mxu0 %v332
    %982 = vmatprep.subr.mxu0 0.0
    %983 = vmatpush1.msra.mxu0 %v331
    %984 = vmatprep.subr.mxu0 0.0
    %985 = vmatpush1.msra.mxu0 %v330
    %986 = vmatprep.subr.mxu0 0.0
    %987 = vmatpush1.msra.mxu0 %v329
    %988 = vmatprep.subr.mxu0 0.0
    %989 = vmatpush1.msra.mxu0 %v328
    %990 = vmatprep.subr.mxu0 0.0
    %991 = vmatpush1.msra.mxu0 %v327
    %992 = vmatprep.subr.mxu0 0.0
    %993 = vmatpush1.msra.mxu0 %v326
    %994 = vmatprep.subr.mxu0 0.0
    %995 = vmatpush1.msra.mxu0 %v325
    %996 = vmatprep.subr.mxu0 0.0
    %997 = vmatpush1.msra.mxu0 %v324
    %998 = vmatprep.subr.mxu0 0.0
    %999 = vmatpush1.msra.mxu0 %v323
    %1000 = vmatprep.subr.mxu0 0.0
    %1001 = vmatpush1.msra.mxu0 %v322
    %1002 = vmatprep.subr.mxu0 0.0
    %1003 = vmatpush1.msra.mxu0 %v321
    %1004 = vmatprep.subr.mxu0 0.0
    %1005 = vmatpush1.msra.mxu0 %v320
    %1006 = vmatprep.subr.mxu0 0.0
    %1007 = vmatpush1.msra.mxu0 %v319
    %1008 = vmatprep.subr.mxu0 0.0
    %1009 = vmatpush2.msra.mxu0 %v350
    %1010 = vmatprep.subr.mxu0 0.0
    %1011 = vmatpush2.msra.mxu0 %v349
    %1012 = vmatprep.subr.mxu0 0.0
    %1013 = vmatpush2.msra.mxu0 %v348
    %1014 = vmatprep.subr.mxu0 0.0
    %1015 = vmatpush2.msra.mxu0 %v347
    %1016 = vmatprep.subr.mxu0 0.0
    %1017 = vmatpush2.msra.mxu0 %v346
    %1018 = vmatprep.subr.mxu0 0.0
    %1019 = vmatpush2.msra.mxu0 %v345
    %1020 = vmatprep.subr.mxu0 0.0
    %1021 = vmatpush2.msra.mxu0 %v344
    %1022 = vmatprep.subr.mxu0 0.0
    %1023 = vmatpush2.msra.mxu0 %v343
    %1024 = vmatprep.subr.mxu0 0.0
    %1025 = vmatpush2.msra.mxu0 %v342
    %1026 = vmatprep.subr.mxu0 0.0
    %1027 = vmatpush2.msra.mxu0 %v341
    %1028 = vmatprep.subr.mxu0 0.0
    %1029 = vmatpush2.msra.mxu0 %v340
    %1030 = vmatprep.subr.mxu0 0.0
    %1031 = vmatpush2.msra.mxu0 %v339
    %1032 = vmatprep.subr.mxu0 0.0
    %1033 = vmatpush2.msra.mxu0 %v338
    %1034 = vmatprep.subr.mxu0 0.0
    %1035 = vmatpush2.msra.mxu0 %v337
    %1036 = vmatprep.subr.mxu0 0.0
    %1037 = vmatpush2.msra.mxu0 %v336
    %1038 = vmatprep.subr.mxu0 0.0
    %1039 = vmatpush2.msra.mxu0 %v335
    %1040 = vmatprep.mubr.f32.mxu0 %v86
    %1041 = vmatmul.mubr.f32.gmra.mxu0 %v85
    %v1042 = vpop.f32.mrf.mxu0
    %v1043 = vadd.f32 %v973, %v1042
    %v1044 = vpop.f32.mrf.mxu0
    %1045 = vdwg.mxu0
    %1046 = vmatprep.subr.mxu0 0.0
    %1047 = vmatpush1.msra.mxu0 %v366
    %1048 = vmatprep.subr.mxu0 0.0
    %1049 = vmatpush1.msra.mxu0 %v365
    %1050 = vmatprep.subr.mxu0 0.0
    %1051 = vmatpush1.msra.mxu0 %v364
    %1052 = vmatprep.subr.mxu0 0.0
    %1053 = vmatpush1.msra.mxu0 %v363
    %1054 = vmatprep.subr.mxu0 0.0
    %1055 = vmatpush1.msra.mxu0 %v362
    %1056 = vmatprep.subr.mxu0 0.0
    %1057 = vmatpush1.msra.mxu0 %v361
    %1058 = vmatprep.subr.mxu0 0.0
    %1059 = vmatpush1.msra.mxu0 %v360
    %1060 = vmatprep.subr.mxu0 0.0
    %1061 = vmatpush1.msra.mxu0 %v359
    %1062 = vmatprep.subr.mxu0 0.0
    %1063 = vmatpush1.msra.mxu0 %v358
    %1064 = vmatprep.subr.mxu0 0.0
    %1065 = vmatpush1.msra.mxu0 %v357
    %1066 = vmatprep.subr.mxu0 0.0
    %1067 = vmatpush1.msra.mxu0 %v356
    %1068 = vmatprep.subr.mxu0 0.0
    %1069 = vmatpush1.msra.mxu0 %v355
    %1070 = vmatprep.subr.mxu0 0.0
    %1071 = vmatpush1.msra.mxu0 %v354
    %1072 = vmatprep.subr.mxu0 0.0
    %1073 = vmatpush1.msra.mxu0 %v353
    %1074 = vmatprep.subr.mxu0 0.0
    %1075 = vmatpush1.msra.mxu0 %v352
    %1076 = vmatprep.subr.mxu0 0.0
    %1077 = vmatpush1.msra.mxu0 %v351
    %1078 = vmatprep.subr.mxu0 0.0
    %1079 = vmatpush2.msra.mxu0 %v382
    %1080 = vmatprep.subr.mxu0 0.0
    %1081 = vmatpush2.msra.mxu0 %v381
    %1082 = vmatprep.subr.mxu0 0.0
    %1083 = vmatpush2.msra.mxu0 %v380
    %1084 = vmatprep.subr.mxu0 0.0
    %1085 = vmatpush2.msra.mxu0 %v379
    %1086 = vmatprep.subr.mxu0 0.0
    %1087 = vmatpush2.msra.mxu0 %v378
    %1088 = vmatprep.subr.mxu0 0.0
    %1089 = vmatpush2.msra.mxu0 %v377
    %1090 = vmatprep.subr.mxu0 0.0
    %1091 = vmatpush2.msra.mxu0 %v376
    %1092 = vmatprep.subr.mxu0 0.0
    %1093 = vmatpush2.msra.mxu0 %v375
    %1094 = vmatprep.subr.mxu0 0.0
    %1095 = vmatpush2.msra.mxu0 %v374
    %1096 = vmatprep.subr.mxu0 0.0
    %1097 = vmatpush2.msra.mxu0 %v373
    %1098 = vmatprep.subr.mxu0 0.0
    %1099 = vmatpush2.msra.mxu0 %v372
    %1100 = vmatprep.subr.mxu0 0.0
    %1101 = vmatpush2.msra.mxu0 %v371
    %1102 = vmatprep.subr.mxu0 0.0
    %1103 = vmatpush2.msra.mxu0 %v370
    %1104 = vmatprep.subr.mxu0 0.0
    %1105 = vmatpush2.msra.mxu0 %v369
    %1106 = vmatprep.subr.mxu0 0.0
    %1107 = vmatpush2.msra.mxu0 %v368
    %1108 = vmatprep.subr.mxu0 0.0
    %1109 = vmatpush2.msra.mxu0 %v367
    %1110 = vmatprep.mubr.f32.mxu0 %v88
    %1111 = vmatmul.mubr.f32.gmra.mxu0 %v87
    %v1112 = vpop.f32.mrf.mxu0
    %v1113 = vadd.f32 %v1043, %v1112
    %v1114 = vpop.f32.mrf.mxu0
    %1115 = vdwg.mxu0
    %1116 = vmatprep.subr.mxu0 0.0
    %1117 = vmatpush1.msra.mxu0 %v398
    %1118 = vmatprep.subr.mxu0 0.0
    %1119 = vmatpush1.msra.mxu0 %v397
    %1120 = vmatprep.subr.mxu0 0.0
    %1121 = vmatpush1.msra.mxu0 %v396
    %1122 = vmatprep.subr.mxu0 0.0
    %1123 = vmatpush1.msra.mxu0 %v395
    %1124 = vmatprep.subr.mxu0 0.0
    %1125 = vmatpush1.msra.mxu0 %v394
    %1126 = vmatprep.subr.mxu0 0.0
    %1127 = vmatpush1.msra.mxu0 %v393
    %1128 = vmatprep.subr.mxu0 0.0
    %1129 = vmatpush1.msra.mxu0 %v392
    %1130 = vmatprep.subr.mxu0 0.0
    %1131 = vmatpush1.msra.mxu0 %v391
    %1132 = vmatprep.subr.mxu0 0.0
    %1133 = vmatpush1.msra.mxu0 %v390
    %1134 = vmatprep.subr.mxu0 0.0
    %1135 = vmatpush1.msra.mxu0 %v389
    %1136 = vmatprep.subr.mxu0 0.0
    %1137 = vmatpush1.msra.mxu0 %v388
    %1138 = vmatprep.subr.mxu0 0.0
    %1139 = vmatpush1.msra.mxu0 %v387
    %1140 = vmatprep.subr.mxu0 0.0
    %1141 = vmatpush1.msra.mxu0 %v386
    %1142 = vmatprep.subr.mxu0 0.0
    %1143 = vmatpush1.msra.mxu0 %v385
    %1144 = vmatprep.subr.mxu0 0.0
    %1145 = vmatpush1.msra.mxu0 %v384
    %1146 = vmatprep.subr.mxu0 0.0
    %1147 = vmatpush1.msra.mxu0 %v383
    %1148 = vmatprep.subr.mxu0 0.0
    %1149 = vmatpush2.msra.mxu0 %v414
    %1150 = vmatprep.subr.mxu0 0.0
    %1151 = vmatpush2.msra.mxu0 %v413
    %1152 = vmatprep.subr.mxu0 0.0
    %1153 = vmatpush2.msra.mxu0 %v412
    %1154 = vmatprep.subr.mxu0 0.0
    %1155 = vmatpush2.msra.mxu0 %v411
    %1156 = vmatprep.subr.mxu0 0.0
    %1157 = vmatpush2.msra.mxu0 %v410
    %1158 = vmatprep.subr.mxu0 0.0
    %1159 = vmatpush2.msra.mxu0 %v409
    %1160 = vmatprep.subr.mxu0 0.0
    %1161 = vmatpush2.msra.mxu0 %v408
    %1162 = vmatprep.subr.mxu0 0.0
    %1163 = vmatpush2.msra.mxu0 %v407
    %1164 = vmatprep.subr.mxu0 0.0
    %1165 = vmatpush2.msra.mxu0 %v406
    %1166 = vmatprep.subr.mxu0 0.0
    %1167 = vmatpush2.msra.mxu0 %v405
    %1168 = vmatprep.subr.mxu0 0.0
    %1169 = vmatpush2.msra.mxu0 %v404
    %1170 = vmatprep.subr.mxu0 0.0
    %1171 = vmatpush2.msra.mxu0 %v403
    %1172 = vmatprep.subr.mxu0 0.0
    %1173 = vmatpush2.msra.mxu0 %v402
    %1174 = vmatprep.subr.mxu0 0.0
    %1175 = vmatpush2.msra.mxu0 %v401
    %1176 = vmatprep.subr.mxu0 0.0
    %1177 = vmatpush2.msra.mxu0 %v400
    %1178 = vmatprep.subr.mxu0 0.0
    %1179 = vmatpush2.msra.mxu0 %v399
    %1180 = vmatprep.mubr.f32.mxu0 %v90
    %1181 = vmatmul.mubr.f32.gmra.mxu0 %v89
    %v1182 = vpop.f32.mrf.mxu0
    %v1183 = vadd.f32 %v1113, %v1182
    %v1184 = vpop.f32.mrf.mxu0
    %1185 = vdwg.mxu0
    %1186 = vmatprep.subr.mxu0 0.0
    %1187 = vmatpush1.msra.mxu0 %v430
    %1188 = vmatprep.subr.mxu0 0.0
    %1189 = vmatpush1.msra.mxu0 %v429
    %1190 = vmatprep.subr.mxu0 0.0
    %1191 = vmatpush1.msra.mxu0 %v428
    %1192 = vmatprep.subr.mxu0 0.0
    %1193 = vmatpush1.msra.mxu0 %v427
    %1194 = vmatprep.subr.mxu0 0.0
    %1195 = vmatpush1.msra.mxu0 %v426
    %1196 = vmatprep.subr.mxu0 0.0
    %1197 = vmatpush1.msra.mxu0 %v425
    %1198 = vmatprep.subr.mxu0 0.0
    %1199 = vmatpush1.msra.mxu0 %v424
    %1200 = vmatprep.subr.mxu0 0.0
    %1201 = vmatpush1.msra.mxu0 %v423
    %1202 = vmatprep.subr.mxu0 0.0
    %1203 = vmatpush1.msra.mxu0 %v422
    %1204 = vmatprep.subr.mxu0 0.0
    %1205 = vmatpush1.msra.mxu0 %v421
    %1206 = vmatprep.subr.mxu0 0.0
    %1207 = vmatpush1.msra.mxu0 %v420
    %1208 = vmatprep.subr.mxu0 0.0
    %1209 = vmatpush1.msra.mxu0 %v419
    %1210 = vmatprep.subr.mxu0 0.0
    %1211 = vmatpush1.msra.mxu0 %v418
    %1212 = vmatprep.subr.mxu0 0.0
    %1213 = vmatpush1.msra.mxu0 %v417
    %1214 = vmatprep.subr.mxu0 0.0
    %1215 = vmatpush1.msra.mxu0 %v416
    %1216 = vmatprep.subr.mxu0 0.0
    %1217 = vmatpush1.msra.mxu0 %v415
    %1218 = vmatprep.subr.mxu0 0.0
    %1219 = vmatpush2.msra.mxu0 %v446
    %1220 = vmatprep.subr.mxu0 0.0
    %1221 = vmatpush2.msra.mxu0 %v445
    %1222 = vmatprep.subr.mxu0 0.0
    %1223 = vmatpush2.msra.mxu0 %v444
    %1224 = vmatprep.subr.mxu0 0.0
    %1225 = vmatpush2.msra.mxu0 %v443
    %1226 = vmatprep.subr.mxu0 0.0
    %1227 = vmatpush2.msra.mxu0 %v442
    %1228 = vmatprep.subr.mxu0 0.0
    %1229 = vmatpush2.msra.mxu0 %v441
    %1230 = vmatprep.subr.mxu0 0.0
    %1231 = vmatpush2.msra.mxu0 %v440
    %1232 = vmatprep.subr.mxu0 0.0
    %1233 = vmatpush2.msra.mxu0 %v439
    %1234 = vmatprep.subr.mxu0 0.0
    %1235 = vmatpush2.msra.mxu0 %v438
    %1236 = vmatprep.subr.mxu0 0.0
    %1237 = vmatpush2.msra.mxu0 %v437
    %1238 = vmatprep.subr.mxu0 0.0
    %1239 = vmatpush2.msra.mxu0 %v436
    %1240 = vmatprep.subr.mxu0 0.0
    %1241 = vmatpush2.msra.mxu0 %v435
    %1242 = vmatprep.subr.mxu0 0.0
    %1243 = vmatpush2.msra.mxu0 %v434
    %1244 = vmatprep.subr.mxu0 0.0
    %1245 = vmatpush2.msra.mxu0 %v433
    %1246 = vmatprep.subr.mxu0 0.0
    %1247 = vmatpush2.msra.mxu0 %v432
    %1248 = vmatprep.subr.mxu0 0.0
    %1249 = vmatpush2.msra.mxu0 %v431
    %1250 = vmatprep.mubr.f32.mxu0 %v92
    %1251 = vmatmul.mubr.f32.gmra.mxu0 %v91
    %v1252 = vpop.f32.mrf.mxu0
    %v1253 = vadd.f32 %v1183, %v1252
    %v1254 = vpop.f32.mrf.mxu0
    %1255 = vdwg.mxu0
    %1256 = vmatprep.subr.mxu0 0.0
    %1257 = vmatpush1.msra.mxu0 %v462
    %1258 = vmatprep.subr.mxu0 0.0
    %1259 = vmatpush1.msra.mxu0 %v461
    %1260 = vmatprep.subr.mxu0 0.0
    %1261 = vmatpush1.msra.mxu0 %v460
    %1262 = vmatprep.subr.mxu0 0.0
    %1263 = vmatpush1.msra.mxu0 %v459
    %1264 = vmatprep.subr.mxu0 0.0
    %1265 = vmatpush1.msra.mxu0 %v458
    %1266 = vmatprep.subr.mxu0 0.0
    %1267 = vmatpush1.msra.mxu0 %v457
    %1268 = vmatprep.subr.mxu0 0.0
    %1269 = vmatpush1.msra.mxu0 %v456
    %1270 = vmatprep.subr.mxu0 0.0
    %1271 = vmatpush1.msra.mxu0 %v455
    %1272 = vmatprep.subr.mxu0 0.0
    %1273 = vmatpush1.msra.mxu0 %v454
    %1274 = vmatprep.subr.mxu0 0.0
    %1275 = vmatpush1.msra.mxu0 %v453
    %1276 = vmatprep.subr.mxu0 0.0
    %1277 = vmatpush1.msra.mxu0 %v452
    %1278 = vmatprep.subr.mxu0 0.0
    %1279 = vmatpush1.msra.mxu0 %v451
    %1280 = vmatprep.subr.mxu0 0.0
    %1281 = vmatpush1.msra.mxu0 %v450
    %1282 = vmatprep.subr.mxu0 0.0
    %1283 = vmatpush1.msra.mxu0 %v449
    %1284 = vmatprep.subr.mxu0 0.0
    %1285 = vmatpush1.msra.mxu0 %v448
    %1286 = vmatprep.subr.mxu0 0.0
    %1287 = vmatpush1.msra.mxu0 %v447
    %1288 = vmatprep.subr.mxu0 0.0
    %1289 = vmatpush2.msra.mxu0 %v478
    %1290 = vmatprep.subr.mxu0 0.0
    %1291 = vmatpush2.msra.mxu0 %v477
    %1292 = vmatprep.subr.mxu0 0.0
    %1293 = vmatpush2.msra.mxu0 %v476
    %1294 = vmatprep.subr.mxu0 0.0
    %1295 = vmatpush2.msra.mxu0 %v475
    %1296 = vmatprep.subr.mxu0 0.0
    %1297 = vmatpush2.msra.mxu0 %v474
    %1298 = vmatprep.subr.mxu0 0.0
    %1299 = vmatpush2.msra.mxu0 %v473
    %1300 = vmatprep.subr.mxu0 0.0
    %1301 = vmatpush2.msra.mxu0 %v472
    %1302 = vmatprep.subr.mxu0 0.0
    %1303 = vmatpush2.msra.mxu0 %v471
    %1304 = vmatprep.subr.mxu0 0.0
    %1305 = vmatpush2.msra.mxu0 %v470
    %1306 = vmatprep.subr.mxu0 0.0
    %1307 = vmatpush2.msra.mxu0 %v469
    %1308 = vmatprep.subr.mxu0 0.0
    %1309 = vmatpush2.msra.mxu0 %v468
    %1310 = vmatprep.subr.mxu0 0.0
    %1311 = vmatpush2.msra.mxu0 %v467
    %1312 = vmatprep.subr.mxu0 0.0
    %1313 = vmatpush2.msra.mxu0 %v466
    %1314 = vmatprep.subr.mxu0 0.0
    %1315 = vmatpush2.msra.mxu0 %v465
    %1316 = vmatprep.subr.mxu0 0.0
    %1317 = vmatpush2.msra.mxu0 %v464
    %1318 = vmatprep.subr.mxu0 0.0
    %1319 = vmatpush2.msra.mxu0 %v463
    %1320 = vmatprep.mubr.f32.mxu0 %v94
    %1321 = vmatmul.mubr.f32.gmra.mxu0 %v93
    %v1322 = vpop.f32.mrf.mxu0
    %v1323 = vadd.f32 %v1253, %v1322
    %v1324 = vpop.f32.mrf.mxu0
    %1325 = vdwg.mxu0
    %v1326 = vtanh.pop %v1323
    %v1327 = vld [vmem:[#allocation6] sm:$0xff]
    %v1328 = vld [vmem:[#allocation6 + $0x8] sm:$0xff]
    %v1329 = vld [vmem:[#allocation6 + $0x10] sm:$0xff]
    %v1330 = vld [vmem:[#allocation6 + $0x18] sm:$0xff]
    %v1331 = vld [vmem:[#allocation6 + $0x20] sm:$0xff]
    %v1332 = vld [vmem:[#allocation6 + $0x28] sm:$0xff]
    %v1333 = vld [vmem:[#allocation6 + $0x30] sm:$0xff]
    %v1334 = vld [vmem:[#allocation6 + $0x38] sm:$0xff]
    %v1335 = vld [vmem:[#allocation6 + $0x40] sm:$0xff]
    %v1336 = vld [vmem:[#allocation6 + $0x48] sm:$0xff]
    %v1337 = vld [vmem:[#allocation6 + $0x50] sm:$0xff]
    %v1338 = vld [vmem:[#allocation6 + $0x58] sm:$0xff]
    %v1339 = vld [vmem:[#allocation6 + $0x60] sm:$0xff]
    %v1340 = vld [vmem:[#allocation6 + $0x68] sm:$0xff]
    %v1341 = vld [vmem:[#allocation6 + $0x70] sm:$0xff]
    %v1342 = vld [vmem:[#allocation6 + $0x78] sm:$0xff]
    %v1343 = vld [vmem:[#allocation7] sm:$0x1]
    %v1345 = vlaneseq
    %v1346 = vshrl.u32 %v1345, 7
    %v1347 = vsub.s32 0, %v1346
    %v1348 = vrot.slane %v1343, %v1347
    %1350 = vmatprep.subr.mxu0 0.0
    %1351 = vmatpush1.msra.mxu0 %v1342
    %1352 = vmatprep.subr.mxu0 0.0
    %1353 = vmatpush1.msra.mxu0 %v1341
    %1354 = vmatprep.subr.mxu0 0.0
    %1355 = vmatpush1.msra.mxu0 %v1340
    %1356 = vmatprep.subr.mxu0 0.0
    %1357 = vmatpush1.msra.mxu0 %v1339
    %1358 = vmatprep.subr.mxu0 0.0
    %1359 = vmatpush1.msra.mxu0 %v1338
    %1360 = vmatprep.subr.mxu0 0.0
    %1361 = vmatpush1.msra.mxu0 %v1337
    %1362 = vmatprep.subr.mxu0 0.0
    %1363 = vmatpush1.msra.mxu0 %v1336
    %1364 = vmatprep.subr.mxu0 0.0
    %1365 = vmatpush1.msra.mxu0 %v1335
    %1366 = vmatprep.subr.mxu0 0.0
    %1367 = vmatpush1.msra.mxu0 %v1334
    %1368 = vmatprep.subr.mxu0 0.0
    %1369 = vmatpush1.msra.mxu0 %v1333
    %1370 = vmatprep.subr.mxu0 0.0
    %1371 = vmatpush1.msra.mxu0 %v1332
    %1372 = vmatprep.subr.mxu0 0.0
    %1373 = vmatpush1.msra.mxu0 %v1331
    %1374 = vmatprep.subr.mxu0 0.0
    %1375 = vmatpush1.msra.mxu0 %v1330
    %1376 = vmatprep.subr.mxu0 0.0
    %1377 = vmatpush1.msra.mxu0 %v1329
    %1378 = vmatprep.subr.mxu0 0.0
    %1379 = vmatpush1.msra.mxu0 %v1328
    %1380 = vmatprep.subr.mxu0 0.0
    %1381 = vmatpush1.msra.mxu0 %v1327
    %1382 = vmatprep.subr.mxu0 0.0
    %1383 = vmatpush2.msra.mxu0 0.0
    %1384 = vmatprep.subr.mxu0 0.0
    %1385 = vmatpush2.msra.mxu0 0.0
    %1386 = vmatprep.subr.mxu0 0.0
    %1387 = vmatpush2.msra.mxu0 0.0
    %1388 = vmatprep.subr.mxu0 0.0
    %1389 = vmatpush2.msra.mxu0 0.0
    %1390 = vmatprep.subr.mxu0 0.0
    %1391 = vmatpush2.msra.mxu0 0.0
    %1392 = vmatprep.subr.mxu0 0.0
    %1393 = vmatpush2.msra.mxu0 0.0
    %1394 = vmatprep.subr.mxu0 0.0
    %1395 = vmatpush2.msra.mxu0 0.0
    %1396 = vmatprep.subr.mxu0 0.0
    %1397 = vmatpush2.msra.mxu0 0.0
    %1398 = vmatprep.subr.mxu0 0.0
    %1399 = vmatpush2.msra.mxu0 0.0
    %1400 = vmatprep.subr.mxu0 0.0
    %1401 = vmatpush2.msra.mxu0 0.0
    %1402 = vmatprep.subr.mxu0 0.0
    %1403 = vmatpush2.msra.mxu0 0.0
    %1404 = vmatprep.subr.mxu0 0.0
    %1405 = vmatpush2.msra.mxu0 0.0
    %1406 = vmatprep.subr.mxu0 0.0
    %1407 = vmatpush2.msra.mxu0 0.0
    %1408 = vmatprep.subr.mxu0 0.0
    %1409 = vmatpush2.msra.mxu0 0.0
    %1410 = vmatprep.subr.mxu0 0.0
    %1411 = vmatpush2.msra.mxu0 0.0
    %1412 = vmatprep.subr.mxu0 0.0
    %1413 = vmatpush2.msra.mxu0 0.0
    %1414 = vmatprep.mubr.f32.mxu0 0.0
    %1415 = vmatmul.mubr.f32.gmra.mxu0 %v1326
    %v1416 = vpop.f32.mrf.mxu0
    %v1417 = vadd.f32 %v1348, %v1416
    %v1418 = vpop.f32.mrf.mxu0
    %1419 = vdwg.mxu0
    %1420 = vst [vmem:[%s5] sm:$0xff] %v1417
    // Predicated region
    $region38: #{neural_net_tanh_forward.1} parent=1 // pred_check
      _
    $region39: #{neural_net_tanh_forward.1} parent=1 // pred_check_branch
      %1422 = sbr.rel (0) target = $region41
    $region40: #{neural_net_tanh_forward.1} parent=1 // pred_region
      _
    $region41: #{neural_net_tanh_forward.1} parent=1 // pred_fallthru
      _
    // Predicated region
    $region42: #{neural_net_tanh_forward.1} parent=1 // pred_check
      _
    $region43: #{neural_net_tanh_forward.1} parent=1 // pred_check_branch
      %1424 = sbr.rel (0) target = $region45
    $region44: #{neural_net_tanh_forward.1} parent=1 // pred_region
      _
    $region45: #{neural_net_tanh_forward.1} parent=1 // pred_fallthru
      _
    %1425 = vsyncpa [#allocation3], 1
    %1426 = vsyncpa [#allocation5], 1
    %1427 = vsyncpa [#allocation8], 1

</llo_original>
